<compile_context>
chip_gen: v7x
topology: tpu7x:2x2x1
jax: 0.10.0
libtpu: 0.0.40
codegen_flags: <defaults>
</compile_context>

<pallas_src>
import jax
import jax.numpy as jnp
import numpy as np
from jax.experimental import pallas as pl
from jax.experimental.pallas import tpu as pltpu

D = 512
N_HIDDEN = 4
EPS = 1e-5


def _dc_kernel(x_ref, w_ref, g_ref, be_ref, w5_ref, b5_ref, out_ref, h_ref):
    """One grid step == one hidden block (Linear -> BN(train stats) -> ReLU).

    Grid axis 0 ("arbitrary", sequential) runs over the 4 hidden blocks.  The
    (B, D) activation scratch `h_ref` carries across steps while the per-layer
    weight tile is auto double-buffered (prefetch of layer l+1 overlaps layer
    l's MXU work).  The final Linear(512, 1) is fused into the last step.
    """
    l = pl.program_id(0)

    @pl.when(l == 0)
    def _():
        h_ref[...] = x_ref[...]

    h = h_ref[...]                                        # (B, D) f32

    # Linear (bias omitted: exactly cancelled by the BN mean subtraction).
    # Operands cast to the stored weight dtype (bf16 default -> native MXU
    # path), accumulation forced to f32.
    z = jnp.dot(h.astype(w_ref.dtype), w_ref[...],
                preferred_element_type=jnp.float32)       # (B, D) f32

    # BatchNorm1d, training mode (biased batch variance), single pass over z:
    # var = E[z^2] - E[z]^2, folded with gamma/beta into one scale/shift.
    # Block shape == logical (B, D), so the axis-0 stats use the logical batch.
    mean = jnp.mean(z, axis=0, keepdims=True)             # (1, D)
    mean_sq = jnp.mean(z * z, axis=0, keepdims=True)      # (1, D)
    var = jnp.maximum(mean_sq - mean * mean, 0.0)
    scale = g_ref[...] * jax.lax.rsqrt(var + EPS)         # (1, D)
    shift = be_ref[...] - mean * scale                    # (1, D)
    h_ref[...] = jnp.maximum(z * scale + shift, 0.0)      # fused BN + ReLU

    # Final Linear(512, 1) as a lane reduction on the last grid step.
    @pl.when(l == pl.num_programs(0) - 1)
    def _():
        hf = h_ref[...]
        out_ref[...] = (
            jnp.sum(hf * w5_ref[...], axis=1, keepdims=True) + b5_ref[...]
        )


def domain_classifier_forward(x, params, weight_dtype=jnp.bfloat16):
    """DomainClassifier forward.

    x: (B, 512) float32, B >= 2 (BatchNorm batch stats); multiples of 8 are
       best for sublane layout but any B is handled correctly.
    params: flat list of 18 arrays in PyTorch order, Linear weights already
       transposed to (in, out):
         4 x (w (512,512), b (1,512), gamma (1,512), beta (1,512)),
         w5 (1,512), b5 (1,1)
    weight_dtype: storage / MXU dtype for the four 512x512 weights (bf16
       default halves weight DMA; jnp.float32 gives exact module numerics).
    """
    B = x.shape[0]
    ws = jnp.stack([params[4 * i + 0] for i in range(N_HIDDEN)]).astype(weight_dtype)   # (4, D, D)
    gs = jnp.stack([params[4 * i + 2].reshape(1, D) for i in range(N_HIDDEN)])          # (4, 1, D)
    bes = jnp.stack([params[4 * i + 3].reshape(1, D) for i in range(N_HIDDEN)])         # (4, 1, D)
    # Hidden-layer Linear biases (params[4*i+1]) are mathematically cancelled
    # by the following train-mode BatchNorm, so they are not sent to the kernel.
    w5 = params[16].reshape(1, D).astype(jnp.float32)
    b5 = params[17].reshape(1, 1).astype(jnp.float32)

    return pl.pallas_call(
        _dc_kernel,
        out_shape=jax.ShapeDtypeStruct((B, 1), jnp.float32),
        grid_spec=pltpu.PrefetchScalarGridSpec(
            num_scalar_prefetch=0,
            grid=(N_HIDDEN,),
            in_specs=[
                pl.BlockSpec((B, D), lambda l: (0, 0)),              # x (fetched once)
                pl.BlockSpec((None, D, D), lambda l: (l, 0, 0)),     # per-layer weight
                pl.BlockSpec((None, 1, D), lambda l: (l, 0, 0)),     # per-layer gamma
                pl.BlockSpec((None, 1, D), lambda l: (l, 0, 0)),     # per-layer beta
                pl.BlockSpec((1, D), lambda l: (0, 0)),              # w5
                pl.BlockSpec((1, 1), lambda l: (0, 0)),              # b5
            ],
            out_specs=pl.BlockSpec((B, 1), lambda l: (0, 0)),
            scratch_shapes=[pltpu.VMEM((B, D), jnp.float32)],        # resident activation
        ),
        compiler_params=pltpu.CompilerParams(
            dimension_semantics=("arbitrary",),
            vmem_limit_bytes=32 << 20,   # right-sized; v7x has only 64 MiB/TC
        ),
    )(x, ws, gs, bes, w5, b5)


def init_params(key):
    """PyTorch-style init (uniform +-1/sqrt(fan_in); BN gamma=1, beta=0).
    Linear weights pre-transposed to (in, out). Returns the full 18-tensor list
    (hidden biases included, even though the kernel provably doesn't need them)."""
    params = []
    bound = 1.0 / np.sqrt(D)
    keys = jax.random.split(key, 10)
    for blk in range(N_HIDDEN):
        kw, kb = keys[2 * blk], keys[2 * blk + 1]
        w = jax.random.uniform(kw, (D, D), jnp.float32, -bound, bound)   # (in, out)
        b = jax.random.uniform(kb, (1, D), jnp.float32, -bound, bound)
        gamma = jnp.ones((1, D), jnp.float32)
        beta = jnp.zeros((1, D), jnp.float32)
        params += [w, b, gamma, beta]
    kw5, kb5 = keys[8], keys[9]
    w5 = jax.random.uniform(kw5, (1, D), jnp.float32, -bound, bound)     # (1, in)
    b5 = jax.random.uniform(kb5, (1, 1), jnp.float32, -bound, bound)
    params += [w5, b5]
    return params


def reference_forward(x, params, matmul_dtype=jnp.float32):
    """Pure-JAX reference of DomainClassifier.forward (train-mode BN, biases
    kept, two-pass variance).  `matmul_dtype` lets the reference mirror the
    kernel's bf16 MXU operands for the quantized configuration."""
    h = x
    for blk in range(N_HIDDEN):
        w, b, g, be = params[4 * blk: 4 * blk + 4]
        z = jnp.dot(h.astype(matmul_dtype), w.astype(matmul_dtype),
                    preferred_element_type=jnp.float32) + b
        mean = jnp.mean(z, axis=0, keepdims=True)
        var = jnp.mean((z - mean) ** 2, axis=0, keepdims=True)
        h = jnp.maximum((z - mean) / jnp.sqrt(var + EPS) * g + be, 0.0)
    w5, b5 = params[16].reshape(1, D), params[17].reshape(1, 1)
    return jnp.sum(h * w5, axis=1, keepdims=True) + b5


if __name__ == "__main__":
    key = jax.random.PRNGKey(0)
    kx, kp = jax.random.split(key)
    B = 128  # MXU-row-aligned demo batch (any B >= 2 works)
    x = jax.random.normal(kx, (B, D), jnp.float32)
    params = init_params(kp)

    # 1) Exact-f32 configuration: must match the original module math tightly
    #    (also validates the bias-drop / fused-BN / single-pass-variance rewrites).
    y_f32 = domain_classifier_forward(x, params, weight_dtype=jnp.float32)
    jax.block_until_ready(y_f32)
    ref_f32 = reference_forward(x, params, jnp.float32)
    np.testing.assert_allclose(np.asarray(y_f32), np.asarray(ref_f32),
                               rtol=1e-4, atol=1e-4)

    # 2) Performance default (bf16 weights / MXU operands, f32 accumulation+BN),
    #    checked against a reference applying the same quantization.  Tolerance
    #    is bf16-appropriate: two independent bf16 pipelines drift through four
    #    normalized layers, so tiny rounding differences get amplified.
    y_bf16 = domain_classifier_forward(x, params, weight_dtype=jnp.bfloat16)
    jax.block_until_ready(y_bf16)
    ref_bf16 = reference_forward(x, params, jnp.bfloat16)
    np.testing.assert_allclose(np.asarray(y_bf16), np.asarray(ref_bf16),
                               rtol=5e-2, atol=5e-2)

    print("KERNEL_OK")
</pallas_src>

<mosaic_0001>
module attributes {stable_mosaic.version = 11 : i64} {
  func.func @_dc_kernel(%arg0: i32, %arg1: memref<128x512xf32, #tpu.memory_space<vmem>>, %arg2: memref<1x512x512xf32, #tpu.memory_space<vmem>>, %arg3: memref<1x1x512xf32, #tpu.memory_space<vmem>>, %arg4: memref<1x1x512xf32, #tpu.memory_space<vmem>>, %arg5: memref<1x512xf32, #tpu.memory_space<vmem>>, %arg6: memref<1x1xf32, #tpu.memory_space<vmem>>, %arg7: memref<128x1xf32, #tpu.memory_space<vmem>>, %arg8: memref<128x512xf32, #tpu.memory_space<vmem>>) attributes {dimension_semantics = [#tpu.dimension_semantics<arbitrary>], iteration_bounds = array<i64: 4>, scalar_prefetch = 0 : i64, scratch_operands = 1 : i64, tpu.core_type = #tpu.core_type<tc>, window_params = [{pipeline_mode = #tpu.pipeline_mode<synchronous>, transform_indices = @transform_0, window_bounds = array<i64: 128, 512>}, {transform_indices = @transform_1, window_bounds = array<i64: 1, 512, 512>}, {transform_indices = @transform_2, window_bounds = array<i64: 1, 1, 512>}, {transform_indices = @transform_3, window_bounds = array<i64: 1, 1, 512>}, {pipeline_mode = #tpu.pipeline_mode<synchronous>, transform_indices = @transform_4, window_bounds = array<i64: 1, 512>}, {pipeline_mode = #tpu.pipeline_mode<synchronous>, transform_indices = @transform_5, window_bounds = array<i64: 1, 1>}, {pipeline_mode = #tpu.pipeline_mode<synchronous>, transform_indices = @transform_6, window_bounds = array<i64: 128, 1>}]} {
    %c0_i32 = arith.constant 0 : i32
    %0 = arith.cmpi eq, %arg0, %c0_i32 : i32
    %1 = arith.extui %0 : i1 to i32
    %c0_i32_0 = arith.constant 0 : i32
    %2 = arith.cmpi ne, %1, %c0_i32_0 : i32
    scf.if %2 {
      %c0_21 = arith.constant 0 : index
      %c0_22 = arith.constant 0 : index
      %40 = vector.load %arg1[%c0_21, %c0_22] : memref<128x512xf32, #tpu.memory_space<vmem>>, vector<128x512xf32>
      %c0_23 = arith.constant 0 : index
      %c0_24 = arith.constant 0 : index
      %41 = vector.load %arg8[%c0_23, %c0_24] : memref<128x512xf32, #tpu.memory_space<vmem>>, vector<128x512xf32>
      tpu.vector_store %arg8[%c0_23, %c0_24], %40 {strides = array<i32>} : memref<128x512xf32, #tpu.memory_space<vmem>>, vector<128x512xf32>,
    } else {
    }
    %c0 = arith.constant 0 : index
    %c0_1 = arith.constant 0 : index
    %3 = vector.load %arg8[%c0, %c0_1] : memref<128x512xf32, #tpu.memory_space<vmem>>, vector<128x512xf32>
    %c0_2 = arith.constant 0 : index
    %c0_3 = arith.constant 0 : index
    %c0_4 = arith.constant 0 : index
    %4 = vector.load %arg2[%c0_2, %c0_3, %c0_4] : memref<1x512x512xf32, #tpu.memory_space<vmem>>, vector<1x512x512xf32>
    %5 = vector.shape_cast %4 : vector<1x512x512xf32> to vector<512x512xf32>
    %cst = arith.constant dense<0.000000e+00> : vector<128x512xf32>
    %6 = tpu.matmul %3, %5, %cst {dimension_numbers = #tpu.dot_dimension_numbers<[1], [0], [0], [1], [0, 0, 1, 1], [], []>} : vector<128x512xf32>, vector<512x512xf32>, vector<128x512xf32> -> vector<128x512xf32>
    %cst_5 = arith.constant dense<0.000000e+00> : vector<512xf32>
    %7 = vector.multi_reduction <add>, %6, %cst_5 [0] : vector<128x512xf32> to vector<512xf32>
    %8 = vector.shape_cast %7 : vector<512xf32> to vector<1x512xf32>
    %cst_6 = arith.constant 1.280000e+02 : f32
    %9 = vector.broadcast %cst_6 : f32 to vector<1x512xf32>
    %10 = arith.divf %8, %9 : vector<1x512xf32>
    %11 = arith.mulf %6, %6 : vector<128x512xf32>
    %cst_7 = arith.constant dense<0.000000e+00> : vector<512xf32>
    %12 = vector.multi_reduction <add>, %11, %cst_7 [0] : vector<128x512xf32> to vector<512xf32>
    %13 = vector.shape_cast %12 : vector<512xf32> to vector<1x512xf32>
    %cst_8 = arith.constant 1.280000e+02 : f32
    %14 = vector.broadcast %cst_8 : f32 to vector<1x512xf32>
    %15 = arith.divf %13, %14 : vector<1x512xf32>
    %16 = arith.mulf %10, %10 : vector<1x512xf32>
    %17 = arith.subf %15, %16 : vector<1x512xf32>
    %cst_9 = arith.constant 0.000000e+00 : f32
    %18 = vector.broadcast %cst_9 : f32 to vector<1x512xf32>
    %19 = arith.maximumf %17, %18 : vector<1x512xf32>
    %c0_10 = arith.constant 0 : index
    %c0_11 = arith.constant 0 : index
    %c0_12 = arith.constant 0 : index
    %20 = vector.load %arg3[%c0_10, %c0_11, %c0_12] : memref<1x1x512xf32, #tpu.memory_space<vmem>>, vector<1x1x512xf32>
    %21 = vector.shape_cast %20 : vector<1x1x512xf32> to vector<1x512xf32>
    %cst_13 = arith.constant 9.99999974E-6 : f32
    %22 = vector.broadcast %cst_13 : f32 to vector<1x512xf32>
    %23 = arith.addf %19, %22 : vector<1x512xf32>
    %24 = math.rsqrt %23 : vector<1x512xf32>
    %25 = arith.mulf %21, %24 : vector<1x512xf32>
    %c0_14 = arith.constant 0 : index
    %c0_15 = arith.constant 0 : index
    %c0_16 = arith.constant 0 : index
    %26 = vector.load %arg4[%c0_14, %c0_15, %c0_16] : memref<1x1x512xf32, #tpu.memory_space<vmem>>, vector<1x1x512xf32>
    %27 = vector.shape_cast %26 : vector<1x1x512xf32> to vector<1x512xf32>
    %28 = arith.mulf %10, %25 : vector<1x512xf32>
    %29 = arith.subf %27, %28 : vector<1x512xf32>
    %30 = vector.broadcast %25 : vector<1x512xf32> to vector<128x512xf32>
    %31 = arith.mulf %6, %30 : vector<128x512xf32>
    %32 = vector.broadcast %29 : vector<1x512xf32> to vector<128x512xf32>
    %33 = arith.addf %31, %32 : vector<128x512xf32>
    %cst_17 = arith.constant 0.000000e+00 : f32
    %34 = vector.broadcast %cst_17 : f32 to vector<128x512xf32>
    %35 = arith.maximumf %33, %34 : vector<128x512xf32>
    %c0_18 = arith.constant 0 : index
    %c0_19 = arith.constant 0 : index
    %36 = vector.load %arg8[%c0_18, %c0_19] : memref<128x512xf32, #tpu.memory_space<vmem>>, vector<128x512xf32>
    tpu.vector_store %arg8[%c0_18, %c0_19], %35 {strides = array<i32>} : memref<128x512xf32, #tpu.memory_space<vmem>>, vector<128x512xf32>,
    %c3_i32 = arith.constant 3 : i32
    %37 = arith.cmpi eq, %arg0, %c3_i32 : i32
    %38 = arith.extui %37 : i1 to i32
    %c0_i32_20 = arith.constant 0 : i32
    %39 = arith.cmpi ne, %38, %c0_i32_20 : i32
    scf.if %39 {
      %c0_21 = arith.constant 0 : index
      %c0_22 = arith.constant 0 : index
      %40 = vector.load %arg8[%c0_21, %c0_22] : memref<128x512xf32, #tpu.memory_space<vmem>>, vector<128x512xf32>
      %c0_23 = arith.constant 0 : index
      %c0_24 = arith.constant 0 : index
      %41 = vector.load %arg5[%c0_23, %c0_24] : memref<1x512xf32, #tpu.memory_space<vmem>>, vector<1x512xf32>
      %42 = vector.broadcast %41 : vector<1x512xf32> to vector<128x512xf32>
      %43 = arith.mulf %40, %42 : vector<128x512xf32>
      %cst_25 = arith.constant dense<0.000000e+00> : vector<128xf32>
      %44 = vector.multi_reduction <add>, %43, %cst_25 [1] : vector<128x512xf32> to vector<128xf32>
      %45 = vector.shape_cast %44 : vector<128xf32> to vector<128x1xf32>
      %c0_26 = arith.constant 0 : index
      %c0_27 = arith.constant 0 : index
      %46 = vector.load %arg6[%c0_26, %c0_27] : memref<1x1xf32, #tpu.memory_space<vmem>>, vector<1x1xf32>
      %47 = vector.broadcast %46 : vector<1x1xf32> to vector<128x1xf32>
      %48 = arith.addf %45, %47 : vector<128x1xf32>
      %c0_28 = arith.constant 0 : index
      %c0_29 = arith.constant 0 : index
      %49 = vector.load %arg7[%c0_28, %c0_29] : memref<128x1xf32, #tpu.memory_space<vmem>>, vector<128x1xf32>
      tpu.vector_store %arg7[%c0_28, %c0_29], %48 {strides = array<i32>} : memref<128x1xf32, #tpu.memory_space<vmem>>, vector<128x1xf32>,
    } else {
    }
    return
  }
  func.func @transform_0(%arg0: i32) -> (i32, i32) {
    %c0_i32 = arith.constant 0 : i32
    %c0_i32_0 = arith.constant 0 : i32
    %c0_i32_1 = arith.constant 0 : i32
    return %c0_i32, %c0_i32_0 : i32, i32
  }
  func.func @transform_1(%arg0: i32) -> (i32, i32, i32) {
    %c0_i32 = arith.constant 0 : i32
    %c0_i32_0 = arith.constant 0 : i32
    %c0_i32_1 = arith.constant 0 : i32
    return %arg0, %c0_i32, %c0_i32_0 : i32, i32, i32
  }
  func.func @transform_2(%arg0: i32) -> (i32, i32, i32) {
    %c0_i32 = arith.constant 0 : i32
    %c0_i32_0 = arith.constant 0 : i32
    %c0_i32_1 = arith.constant 0 : i32
    return %arg0, %c0_i32, %c0_i32_0 : i32, i32, i32
  }
  func.func @transform_3(%arg0: i32) -> (i32, i32, i32) {
    %c0_i32 = arith.constant 0 : i32
    %c0_i32_0 = arith.constant 0 : i32
    %c0_i32_1 = arith.constant 0 : i32
    return %arg0, %c0_i32, %c0_i32_0 : i32, i32, i32
  }
  func.func @transform_4(%arg0: i32) -> (i32, i32) {
    %c0_i32 = arith.constant 0 : i32
    %c0_i32_0 = arith.constant 0 : i32
    %c0_i32_1 = arith.constant 0 : i32
    return %c0_i32, %c0_i32_0 : i32, i32
  }
  func.func @transform_5(%arg0: i32) -> (i32, i32) {
    %c0_i32 = arith.constant 0 : i32
    %c0_i32_0 = arith.constant 0 : i32
    %c0_i32_1 = arith.constant 0 : i32
    return %c0_i32, %c0_i32_0 : i32, i32
  }
  func.func @transform_6(%arg0: i32) -> (i32, i32) {
    %c0_i32 = arith.constant 0 : i32
    %c0_i32_0 = arith.constant 0 : i32
    %c0_i32_1 = arith.constant 0 : i32
    return %c0_i32, %c0_i32_0 : i32, i32
  }
}

</mosaic_0001>

<llo_original>
// kernel: tpu_custom_call.1
$region0: #{tpu_custom_call.1}
  #allocation0 [shape = 'u32[]', space=smem, size = 0x4, offset = 0x4, fixed_abs, tag = 'smem constant byte address 0x4 - core index']
  #allocation1 [shape = 'u32[144,128]{1,0:T(1,128)}', space=vmem, size = 0x12000, scoped, tag = 'internal scratch']
  #allocation2 [shape = 'f32[128,512]{1,0:T(8,128)}', space=vmem, size = 0x40000, scoped, tag = 'scratch operand']
  #allocation3 [shape = 'f32[1,1]{1,0:T(1,128)S(1)}', space=vmem, size = 0x200, scoped, tag = 'scoped memory for tpu_custom_call.1']
  %s0 = inlined_call_operand.hbm [shape: f32[128,512], index: 0, kind: input, shape index: {}]
  %s1 = inlined_call_operand.hbm [shape: f32[4,512,512], index: 1, kind: input, shape index: {}]
  %s2 = inlined_call_operand.hbm [shape: f32[4,1,512], index: 2, kind: input, shape index: {}]
  %s3 = inlined_call_operand.hbm [shape: f32[4,1,512], index: 3, kind: input, shape index: {}]
  %s4 = inlined_call_operand.hbm [shape: f32[1,512], index: 4, kind: input, shape index: {}]
  %s5 = inlined_call_operand.<no memory space> [shape: f32[1,1], index: 5, kind: input, shape index: {}]
  %s6 = inlined_call_operand.vmem [shape: f32[128,1], index: 6, kind: output, shape index: {}]
  %s7 = sld [smem:[#allocation0]]
  $region85: #{tpu_custom_call.1} parent=0
    _
  %s9 = ssub.s32 1, %s7
  %s10 = scalar_select 0, %s9, %s7
  %v11 = vstv %s5
  %12 = vst [vmem:[#allocation3] sm:$0x1] %v11
  $region1: #{tpu_custom_call.1} parent=0
    #allocation4 [shape = 'u8[262144]{0}', space=vmem, size = 0x40000, scoped, tag = 'input window, operand 0, single buffered']
    #allocation5 [shape = 's32[2]{0}', space=sflag, size = 0x8, scoped, tag = 'scoped memory for tpu_custom_call.1']
    #allocation6 [shape = 'u8[2097152]{0}', space=vmem, size = 0x200000, scoped, tag = 'input window, operand 1']
    #allocation7 [shape = 's32[2]{0}', space=sflag, size = 0x8, scoped, tag = 'scoped memory for tpu_custom_call.1']
    #allocation8 [shape = 'u8[4096]{0}', space=vmem, size = 0x1000, scoped, tag = 'input window, operand 2']
    #allocation9 [shape = 'u8[4096]{0}', space=vmem, size = 0x1000, scoped, tag = 'input window, operand 3']
    #allocation10 [shape = 's32[2]{0}', space=sflag, size = 0x8, scoped, tag = 'scoped memory for tpu_custom_call.1']
    #allocation11 [shape = 'u8[2048]{0}', space=vmem, size = 0x800, scoped, tag = 'input window, operand 4, single buffered']
    %13 = vsyncpa [#allocation5], 0
    %14 = vsyncpa [#allocation7], 0
    %s15 = scalar_lea.sflag [#allocation7], 1
    %16 = vsyncpa %s15, 0
    %17 = vsyncpa [#allocation10], 0
    %s18 = scalar_lea.sflag [#allocation10], 1
    %19 = vsyncpa %s18, 0
    loop: start=0, step=1, limit=6
    $region2: #{tpu_custom_call.1} parent=1 // loop_pre_header
      _
    $region3: #{tpu_custom_call.1} parent=1 // loop_header
      %s21 = sphi 0, %s25
      %p22 = scmp.ge.s32.totalorder %s21, 6
      %s29 = sphi 0, %s29
      %s31 = sphi 0, %s29
      %s32 = sphi 0, %s31
      %s46 = sphi 0, %s32
      %s52 = sphi 0, %s54
      %s55 = sphi 0, %s52
      %s56 = sphi 0, %s55
      %s72 = sphi 0, %s56
      %s78 = sphi 0, %s80
      %s81 = sphi 0, %s78
      %s82 = sphi 0, %s81
      %s98 = sphi 0, %s82
      %s104 = sphi 0, %s106
      %s107 = sphi 0, %s104
      %s108 = sphi 0, %s107
      %s124 = sphi 0, %s108
      %s128 = sphi 0, %s128
      %s130 = sphi 0, %s128
      %s131 = sphi 0, %s130
      %s145 = sphi 0, %s131
      %s149 = sphi 0, %s149
      %s151 = sphi 0, %s149
      %s152 = sphi 0, %s151
      %s166 = sphi 0, %s152
      %s170 = sphi 0, %s170
      %s172 = sphi 0, %s170
      %s173 = sphi 0, %s172
      %s187 = sphi 0, %s173
    $region4: #{tpu_custom_call.1} parent=1 // loop_header_branch
      %24 = sbr.rel (%p22) target = $region8
    $region5: #{tpu_custom_call.1} parent=1 // loop_body
      %s26 = ssub.s32 %s21, 1
      %s27 = ssub.s32 %s21, 2
      %s28 = sadd.s32 %s21, 1
      %s30 = sadd.s32 %s29, 1
      %p33 = scmp.eq.s32.totalorder %s21, 3
      %p34 = scmp.ne.s32.totalorder %s29, %s31
      %p35 = scmp.eq.s32.totalorder %s21, 0
      %p36 = por %p34, %p35
      %p37 = scmp.ne.s32.totalorder %s29, %s31
      %p38 = scmp.eq.s32.totalorder %s26, 3
      %p39 = por %p37, %p38
      %p40 = scmp.ne.s32.totalorder %s31, %s32
      %p41 = scmp.eq.s32.totalorder %s26, 0
      %p42 = por %p40, %p41
      %p43 = scmp.ne.s32.totalorder %s31, %s32
      %p44 = scmp.eq.s32.totalorder %s27, 3
      %p45 = por %p43, %p44
      %p47 = scmp.ne.s32.totalorder %s32, %s46
      %p48 = scmp.eq.s32.totalorder %s27, 0
      %p49 = por %p47, %p48
      %s50 = ssub.s32 %s21, %s28
      %p51 = scmp.eq.s32.totalorder %s50, 0
      %s53 = sadd.s32 %s52, 1
      %s54 = scalar_select %p51, %s52, %s53
      %p57 = pneg %p51
      %p58 = scmp.eq.s32.totalorder %s21, 3
      %p59 = por %p57, %p58
      %p60 = scmp.ne.s32.totalorder %s52, %s55
      %p61 = scmp.eq.s32.totalorder %s21, 0
      %p62 = por %p60, %p61
      %p63 = scmp.ne.s32.totalorder %s52, %s55
      %p64 = scmp.eq.s32.totalorder %s26, 3
      %p65 = por %p63, %p64
      %p66 = scmp.ne.s32.totalorder %s55, %s56
      %p67 = scmp.eq.s32.totalorder %s26, 0
      %p68 = por %p66, %p67
      %p69 = scmp.ne.s32.totalorder %s55, %s56
      %p70 = scmp.eq.s32.totalorder %s27, 3
      %p71 = por %p69, %p70
      %p73 = scmp.ne.s32.totalorder %s56, %s72
      %p74 = scmp.eq.s32.totalorder %s27, 0
      %p75 = por %p73, %p74
      %s76 = ssub.s32 %s21, %s28
      %p77 = scmp.eq.s32.totalorder %s76, 0
      %s79 = sadd.s32 %s78, 1
      %s80 = scalar_select %p77, %s78, %s79
      %p83 = pneg %p77
      %p84 = scmp.eq.s32.totalorder %s21, 3
      %p85 = por %p83, %p84
      %p86 = scmp.ne.s32.totalorder %s78, %s81
      %p87 = scmp.eq.s32.totalorder %s21, 0
      %p88 = por %p86, %p87
      %p89 = scmp.ne.s32.totalorder %s78, %s81
      %p90 = scmp.eq.s32.totalorder %s26, 3
      %p91 = por %p89, %p90
      %p92 = scmp.ne.s32.totalorder %s81, %s82
      %p93 = scmp.eq.s32.totalorder %s26, 0
      %p94 = por %p92, %p93
      %p95 = scmp.ne.s32.totalorder %s81, %s82
      %p96 = scmp.eq.s32.totalorder %s27, 3
      %p97 = por %p95, %p96
      %p99 = scmp.ne.s32.totalorder %s82, %s98
      %p100 = scmp.eq.s32.totalorder %s27, 0
      %p101 = por %p99, %p100
      %s102 = ssub.s32 %s21, %s28
      %p103 = scmp.eq.s32.totalorder %s102, 0
      %s105 = sadd.s32 %s104, 1
      %s106 = scalar_select %p103, %s104, %s105
      %p109 = pneg %p103
      %p110 = scmp.eq.s32.totalorder %s21, 3
      %p111 = por %p109, %p110
      %p112 = scmp.ne.s32.totalorder %s104, %s107
      %p113 = scmp.eq.s32.totalorder %s21, 0
      %p114 = por %p112, %p113
      %p115 = scmp.ne.s32.totalorder %s104, %s107
      %p116 = scmp.eq.s32.totalorder %s26, 3
      %p117 = por %p115, %p116
      %p118 = scmp.ne.s32.totalorder %s107, %s108
      %p119 = scmp.eq.s32.totalorder %s26, 0
      %p120 = por %p118, %p119
      %p121 = scmp.ne.s32.totalorder %s107, %s108
      %p122 = scmp.eq.s32.totalorder %s27, 3
      %p123 = por %p121, %p122
      %p125 = scmp.ne.s32.totalorder %s108, %s124
      %p126 = scmp.eq.s32.totalorder %s27, 0
      %p127 = por %p125, %p126
      %s129 = sadd.s32 %s128, 1
      %p132 = scmp.eq.s32.totalorder %s21, 3
      %p133 = scmp.ne.s32.totalorder %s128, %s130
      %p134 = scmp.eq.s32.totalorder %s21, 0
      %p135 = por %p133, %p134
      %p136 = scmp.ne.s32.totalorder %s128, %s130
      %p137 = scmp.eq.s32.totalorder %s26, 3
      %p138 = por %p136, %p137
      %p139 = scmp.ne.s32.totalorder %s130, %s131
      %p140 = scmp.eq.s32.totalorder %s26, 0
      %p141 = por %p139, %p140
      %p142 = scmp.ne.s32.totalorder %s130, %s131
      %p143 = scmp.eq.s32.totalorder %s27, 3
      %p144 = por %p142, %p143
      %p146 = scmp.ne.s32.totalorder %s131, %s145
      %p147 = scmp.eq.s32.totalorder %s27, 0
      %p148 = por %p146, %p147
      %s150 = sadd.s32 %s149, 1
      %p153 = scmp.eq.s32.totalorder %s21, 3
      %p154 = scmp.ne.s32.totalorder %s149, %s151
      %p155 = scmp.eq.s32.totalorder %s21, 0
      %p156 = por %p154, %p155
      %p157 = scmp.ne.s32.totalorder %s149, %s151
      %p158 = scmp.eq.s32.totalorder %s26, 3
      %p159 = por %p157, %p158
      %p160 = scmp.ne.s32.totalorder %s151, %s152
      %p161 = scmp.eq.s32.totalorder %s26, 0
      %p162 = por %p160, %p161
      %p163 = scmp.ne.s32.totalorder %s151, %s152
      %p164 = scmp.eq.s32.totalorder %s27, 3
      %p165 = por %p163, %p164
      %p167 = scmp.ne.s32.totalorder %s152, %s166
      %p168 = scmp.eq.s32.totalorder %s27, 0
      %p169 = por %p167, %p168
      %s171 = sadd.s32 %s170, 1
      %p174 = scmp.eq.s32.totalorder %s21, 3
      %p175 = scmp.ne.s32.totalorder %s170, %s172
      %p176 = scmp.eq.s32.totalorder %s21, 0
      %p177 = por %p175, %p176
      %p178 = scmp.ne.s32.totalorder %s170, %s172
      %p179 = scmp.eq.s32.totalorder %s26, 3
      %p180 = por %p178, %p179
      %p181 = scmp.ne.s32.totalorder %s172, %s173
      %p182 = scmp.eq.s32.totalorder %s26, 0
      %p183 = por %p181, %p182
      %p184 = scmp.ne.s32.totalorder %s172, %s173
      %p185 = scmp.eq.s32.totalorder %s27, 3
      %p186 = por %p184, %p185
      %p188 = scmp.ne.s32.totalorder %s173, %s187
      %p189 = scmp.eq.s32.totalorder %s27, 0
      %p190 = por %p188, %p189
      %p191 = scmp.le.s32.totalorder 1, %s21
      %p192 = scmp.lt.s32.totalorder %s21, 5
      %p193 = pnand %p191, %p192
      %p194 = pneg %p193
      // Predicated region
      $region9: #{tpu_custom_call.1} parent=5 // pred_check
        _
      $region10: #{tpu_custom_call.1} parent=5 // pred_check_branch
        %196 = sbr.rel (%p193) target = $region12
      $region11: #{tpu_custom_call.1} parent=5 // pred_region
        %s197 = ssub.s32 %s21, 1
        // Predicated region
        $region13: #{tpu_custom_call.1} parent=11 // pred_check
          %p198 = pneg %p42
        $region14: #{tpu_custom_call.1} parent=11 // pred_check_branch
          %200 = sbr.rel (%p198) target = $region16
        $region15: #{tpu_custom_call.1} parent=11 // pred_region
          %s202 = ssub.s32 8192, 8192
          %203 = vsyncadd [#allocation5], %s202
          %s204 = sshll.u32 [#allocation4], 4
          %s205 = int_to_ptr.vmem [resolvable:$true] %s204
          %210 = dma.hbm_to_vmem [thread:$0]  %s0, 8192, %s205, [#allocation5], 512, 512, 32
        $region16: #{tpu_custom_call.1} parent=11 // pred_fallthru
          _
        // Predicated region
        $region17: #{tpu_custom_call.1} parent=11 // pred_check
          %p211 = pneg %p141
        $region18: #{tpu_custom_call.1} parent=11 // pred_check_branch
          %213 = sbr.rel (%p211) target = $region20
        $region19: #{tpu_custom_call.1} parent=11 // pred_region
          %s215 = ssub.s32 64, 64
          %216 = vsyncadd [#allocation10], %s215
          %s218 = sshll.u32 [#allocation11], 4
          %s219 = int_to_ptr.vmem [resolvable:$true] %s218
          %221 = dma.hbm_to_vmem [thread:$0]  %s4, 64, %s219, [#allocation10]
        $region20: #{tpu_custom_call.1} parent=11 // pred_fallthru
          _
        // Predicated region
        $region21: #{tpu_custom_call.1} parent=11 // pred_check
          %p222 = pneg %p162
        $region22: #{tpu_custom_call.1} parent=11 // pred_check_branch
          %224 = sbr.rel (%p222) target = $region24
        $region23: #{tpu_custom_call.1} parent=11 // pred_region
          _
        $region24: #{tpu_custom_call.1} parent=11 // pred_fallthru
          _
      $region12: #{tpu_custom_call.1} parent=5 // pred_fallthru
        _
      %p225 = scmp.lt.s32.totalorder %s21, 4
      // Predicated region
      $region25: #{tpu_custom_call.1} parent=5 // pred_check
        %p226 = pneg %p225
      $region26: #{tpu_custom_call.1} parent=5 // pred_check_branch
        %228 = sbr.rel (%p226) target = $region28
      $region27: #{tpu_custom_call.1} parent=5 // pred_region
        // Predicated region
        $region29: #{tpu_custom_call.1} parent=27 // pred_check
          %p229 = pneg %p62
        $region30: #{tpu_custom_call.1} parent=27 // pred_check_branch
          %231 = sbr.rel (%p229) target = $region32
        $region31: #{tpu_custom_call.1} parent=27 // pred_region
          %s232 = sand.u32 %s21, 1
          %s233 = scalar_lea.sflag [#allocation7], %s232
          %s234 = sand.u32 %s52, 1
          %s235 = smul.addr %s234, 2048
          %s236 = scalar_lea.vmem [#allocation6], %s235
          %s238 = ssub.s32 32768, 32768
          %239 = vsyncadd %s233, %s238
          %s240 = smul.addr %s21, 256
          %s241 = smul.addr %s240, 128
          %s242 = scalar_lea.hbm %s1, %s241
          %s243 = sshll.u32 %s236, 4
          %s244 = int_to_ptr.vmem [resolvable:$true] %s243
          %249 = dma.hbm_to_vmem [thread:$0]  %s242, 32768, %s244, %s233, 512, 512, 32
        $region32: #{tpu_custom_call.1} parent=27 // pred_fallthru
          _
        // Predicated region
        $region33: #{tpu_custom_call.1} parent=27 // pred_check
          %p250 = pneg %p88
        $region34: #{tpu_custom_call.1} parent=27 // pred_check_branch
          %252 = sbr.rel (%p250) target = $region36
        $region35: #{tpu_custom_call.1} parent=27 // pred_region
          %s253 = sand.u32 %s21, 1
          %s254 = scalar_lea.sflag [#allocation7], %s253
          %s255 = sand.u32 %s78, 1
          %s256 = smul.addr %s255, 4
          %s257 = scalar_lea.vmem [#allocation8], %s256
          %s259 = ssub.s32 64, 64
          %260 = vsyncadd %s254, %s259
          %s261 = smul.addr %s21, 4
          %s262 = smul.addr %s261, 16
          %s263 = scalar_lea.hbm %s2, %s262
          %s265 = sshll.u32 %s257, 4
          %s266 = int_to_ptr.vmem [resolvable:$true] %s265
          %268 = dma.hbm_to_vmem [thread:$0]  %s263, 64, %s266, %s254
        $region36: #{tpu_custom_call.1} parent=27 // pred_fallthru
          _
        // Predicated region
        $region37: #{tpu_custom_call.1} parent=27 // pred_check
          %p269 = pneg %p114
        $region38: #{tpu_custom_call.1} parent=27 // pred_check_branch
          %271 = sbr.rel (%p269) target = $region40
        $region39: #{tpu_custom_call.1} parent=27 // pred_region
          %s272 = sand.u32 %s21, 1
          %s273 = scalar_lea.sflag [#allocation10], %s272
          %s274 = sand.u32 %s104, 1
          %s275 = smul.addr %s274, 4
          %s276 = scalar_lea.vmem [#allocation9], %s275
          %s278 = ssub.s32 64, 64
          %279 = vsyncadd %s273, %s278
          %s280 = smul.addr %s21, 4
          %s281 = smul.addr %s280, 16
          %s282 = scalar_lea.hbm %s3, %s281
          %s284 = sshll.u32 %s276, 4
          %s285 = int_to_ptr.vmem [resolvable:$true] %s284
          %287 = dma.hbm_to_vmem [thread:$0]  %s282, 64, %s285, %s273
        $region40: #{tpu_custom_call.1} parent=27 // pred_fallthru
          _
      $region28: #{tpu_custom_call.1} parent=5 // pred_fallthru
        _
      %p288 = scmp.le.s32.totalorder 1, %s21
      %p289 = scmp.lt.s32.totalorder %s21, 5
      %p290 = pnand %p288, %p289
      %p291 = pneg %p290
      // Predicated region
      $region41: #{tpu_custom_call.1} parent=5 // pred_check
        _
      $region42: #{tpu_custom_call.1} parent=5 // pred_check_branch
        %293 = sbr.rel (%p290) target = $region44
      $region43: #{tpu_custom_call.1} parent=5 // pred_region
        %s294 = ssub.s32 %s21, 1
        // Predicated region
        $region45: #{tpu_custom_call.1} parent=43 // pred_check
          %p295 = pneg %p42
        $region46: #{tpu_custom_call.1} parent=43 // pred_check_branch
          %297 = sbr.rel (%p295) target = $region48
        $region47: #{tpu_custom_call.1} parent=43 // pred_region
          %298 = dma.done [#allocation5], 8192
        $region48: #{tpu_custom_call.1} parent=43 // pred_fallthru
          _
        %s299 = sand.u32 %s26, 1
        %s300 = scalar_lea.sflag [#allocation7], %s299
        %s301 = sand.u32 %s55, 1
        %s302 = smul.addr %s301, 2048
        %s303 = scalar_lea.vmem [#allocation6], %s302
        // Predicated region
        $region49: #{tpu_custom_call.1} parent=43 // pred_check
          %p304 = pneg %p68
        $region50: #{tpu_custom_call.1} parent=43 // pred_check_branch
          %306 = sbr.rel (%p304) target = $region52
        $region51: #{tpu_custom_call.1} parent=43 // pred_region
          %307 = dma.done %s300, 32768
        $region52: #{tpu_custom_call.1} parent=43 // pred_fallthru
          _
        %s308 = sand.u32 %s26, 1
        %s309 = scalar_lea.sflag [#allocation7], %s308
        %s310 = sand.u32 %s81, 1
        %s311 = smul.addr %s310, 4
        %s312 = scalar_lea.vmem [#allocation8], %s311
        // Predicated region
        $region53: #{tpu_custom_call.1} parent=43 // pred_check
          %p313 = pneg %p94
        $region54: #{tpu_custom_call.1} parent=43 // pred_check_branch
          %315 = sbr.rel (%p313) target = $region56
        $region55: #{tpu_custom_call.1} parent=43 // pred_region
          %316 = dma.done %s309, 64
        $region56: #{tpu_custom_call.1} parent=43 // pred_fallthru
          _
        %s317 = sand.u32 %s26, 1
        %s318 = scalar_lea.sflag [#allocation10], %s317
        %s319 = sand.u32 %s107, 1
        %s320 = smul.addr %s319, 4
        %s321 = scalar_lea.vmem [#allocation9], %s320
        // Predicated region
        $region57: #{tpu_custom_call.1} parent=43 // pred_check
          %p322 = pneg %p120
        $region58: #{tpu_custom_call.1} parent=43 // pred_check_branch
          %324 = sbr.rel (%p322) target = $region60
        $region59: #{tpu_custom_call.1} parent=43 // pred_region
          %325 = dma.done %s318, 64
        $region60: #{tpu_custom_call.1} parent=43 // pred_fallthru
          _
        // Predicated region
        $region61: #{tpu_custom_call.1} parent=43 // pred_check
          %p326 = pneg %p141
        $region62: #{tpu_custom_call.1} parent=43 // pred_check_branch
          %328 = sbr.rel (%p326) target = $region64
        $region63: #{tpu_custom_call.1} parent=43 // pred_region
          %329 = dma.done [#allocation10], 64
        $region64: #{tpu_custom_call.1} parent=43 // pred_fallthru
          _
        %p330 = pneg %p42
        %p331 = pneg %p39
        %s332 = sand.u32 %s26, 1
        %s333 = scalar_lea.sflag [#allocation7], %s332
        %s334 = sand.u32 %s55, 1
        %s335 = smul.addr %s334, 2048
        %s336 = scalar_lea.vmem [#allocation6], %s335
        %p337 = pneg %p68
        %p338 = pneg %p65
        %s339 = sand.u32 %s26, 1
        %s340 = scalar_lea.sflag [#allocation7], %s339
        %s341 = sand.u32 %s81, 1
        %s342 = smul.addr %s341, 4
        %s343 = scalar_lea.vmem [#allocation8], %s342
        %p344 = pneg %p94
        %p345 = pneg %p91
        %s346 = sand.u32 %s26, 1
        %s347 = scalar_lea.sflag [#allocation10], %s346
        %s348 = sand.u32 %s107, 1
        %s349 = smul.addr %s348, 4
        %s350 = scalar_lea.vmem [#allocation9], %s349
        %p351 = pneg %p120
        %p352 = pneg %p117
        %p353 = pneg %p141
        %p354 = pneg %p138
        %p355 = pneg %p162
        %p356 = pneg %p159
        %p357 = pneg %p183
        %p358 = pneg %p180
        %p359 = scmp.eq.s32.totalorder %s26, 0
        // Predicated region
        $region65: #{tpu_custom_call.1} parent=43 // pred_check
          %p360 = pneg %p359
        $region66: #{tpu_custom_call.1} parent=43 // pred_check_branch
          %362 = sbr.rel (%p360) target = $region68
        $region67: #{tpu_custom_call.1} parent=43 // pred_region
          %v363 = vld [vmem:[#allocation4] sm:$0xff]
          %v364 = vld [vmem:[#allocation4 + $0x8] sm:$0xff]
          %v365 = vld [vmem:[#allocation4 + $0x10] sm:$0xff]
          %v366 = vld [vmem:[#allocation4 + $0x18] sm:$0xff]
          %v367 = vld [vmem:[#allocation4 + $0x20] sm:$0xff]
          %v368 = vld [vmem:[#allocation4 + $0x28] sm:$0xff]
          %v369 = vld [vmem:[#allocation4 + $0x30] sm:$0xff]
          %v370 = vld [vmem:[#allocation4 + $0x38] sm:$0xff]
          %v371 = vld [vmem:[#allocation4 + $0x40] sm:$0xff]
          %v372 = vld [vmem:[#allocation4 + $0x48] sm:$0xff]
          %v373 = vld [vmem:[#allocation4 + $0x50] sm:$0xff]
          %v374 = vld [vmem:[#allocation4 + $0x58] sm:$0xff]
          %v375 = vld [vmem:[#allocation4 + $0x60] sm:$0xff]
          %v376 = vld [vmem:[#allocation4 + $0x68] sm:$0xff]
          %v377 = vld [vmem:[#allocation4 + $0x70] sm:$0xff]
          %v378 = vld [vmem:[#allocation4 + $0x78] sm:$0xff]
          %v379 = vld [vmem:[#allocation4 + $0x80] sm:$0xff]
          %v380 = vld [vmem:[#allocation4 + $0x88] sm:$0xff]
          %v381 = vld [vmem:[#allocation4 + $0x90] sm:$0xff]
          %v382 = vld [vmem:[#allocation4 + $0x98] sm:$0xff]
          %v383 = vld [vmem:[#allocation4 + $0xa0] sm:$0xff]
          %v384 = vld [vmem:[#allocation4 + $0xa8] sm:$0xff]
          %v385 = vld [vmem:[#allocation4 + $0xb0] sm:$0xff]
          %v386 = vld [vmem:[#allocation4 + $0xb8] sm:$0xff]
          %v387 = vld [vmem:[#allocation4 + $0xc0] sm:$0xff]
          %v388 = vld [vmem:[#allocation4 + $0xc8] sm:$0xff]
          %v389 = vld [vmem:[#allocation4 + $0xd0] sm:$0xff]
          %v390 = vld [vmem:[#allocation4 + $0xd8] sm:$0xff]
          %v391 = vld [vmem:[#allocation4 + $0xe0] sm:$0xff]
          %v392 = vld [vmem:[#allocation4 + $0xe8] sm:$0xff]
          %v393 = vld [vmem:[#allocation4 + $0xf0] sm:$0xff]
          %v394 = vld [vmem:[#allocation4 + $0xf8] sm:$0xff]
          %v395 = vld [vmem:[#allocation4 + $0x100] sm:$0xff]
          %v396 = vld [vmem:[#allocation4 + $0x108] sm:$0xff]
          %v397 = vld [vmem:[#allocation4 + $0x110] sm:$0xff]
          %v398 = vld [vmem:[#allocation4 + $0x118] sm:$0xff]
          %v399 = vld [vmem:[#allocation4 + $0x120] sm:$0xff]
          %v400 = vld [vmem:[#allocation4 + $0x128] sm:$0xff]
          %v401 = vld [vmem:[#allocation4 + $0x130] sm:$0xff]
          %v402 = vld [vmem:[#allocation4 + $0x138] sm:$0xff]
          %v403 = vld [vmem:[#allocation4 + $0x140] sm:$0xff]
          %v404 = vld [vmem:[#allocation4 + $0x148] sm:$0xff]
          %v405 = vld [vmem:[#allocation4 + $0x150] sm:$0xff]
          %v406 = vld [vmem:[#allocation4 + $0x158] sm:$0xff]
          %v407 = vld [vmem:[#allocation4 + $0x160] sm:$0xff]
          %v408 = vld [vmem:[#allocation4 + $0x168] sm:$0xff]
          %v409 = vld [vmem:[#allocation4 + $0x170] sm:$0xff]
          %v410 = vld [vmem:[#allocation4 + $0x178] sm:$0xff]
          %v411 = vld [vmem:[#allocation4 + $0x180] sm:$0xff]
          %v412 = vld [vmem:[#allocation4 + $0x188] sm:$0xff]
          %v413 = vld [vmem:[#allocation4 + $0x190] sm:$0xff]
          %v414 = vld [vmem:[#allocation4 + $0x198] sm:$0xff]
          %v415 = vld [vmem:[#allocation4 + $0x1a0] sm:$0xff]
          %v416 = vld [vmem:[#allocation4 + $0x1a8] sm:$0xff]
          %v417 = vld [vmem:[#allocation4 + $0x1b0] sm:$0xff]
          %v418 = vld [vmem:[#allocation4 + $0x1b8] sm:$0xff]
          %v419 = vld [vmem:[#allocation4 + $0x1c0] sm:$0xff]
          %v420 = vld [vmem:[#allocation4 + $0x1c8] sm:$0xff]
          %v421 = vld [vmem:[#allocation4 + $0x1d0] sm:$0xff]
          %v422 = vld [vmem:[#allocation4 + $0x1d8] sm:$0xff]
          %v423 = vld [vmem:[#allocation4 + $0x1e0] sm:$0xff]
          %v424 = vld [vmem:[#allocation4 + $0x1e8] sm:$0xff]
          %v425 = vld [vmem:[#allocation4 + $0x1f0] sm:$0xff]
          %v426 = vld [vmem:[#allocation4 + $0x1f8] sm:$0xff]
          %427 = vst [vmem:[#allocation2] sm:$0xff] %v363
          %428 = vst [vmem:[#allocation2 + $0x8] sm:$0xff] %v364
          %429 = vst [vmem:[#allocation2 + $0x10] sm:$0xff] %v365
          %430 = vst [vmem:[#allocation2 + $0x18] sm:$0xff] %v366
          %431 = vst [vmem:[#allocation2 + $0x20] sm:$0xff] %v367
          %432 = vst [vmem:[#allocation2 + $0x28] sm:$0xff] %v368
          %433 = vst [vmem:[#allocation2 + $0x30] sm:$0xff] %v369
          %434 = vst [vmem:[#allocation2 + $0x38] sm:$0xff] %v370
          %435 = vst [vmem:[#allocation2 + $0x40] sm:$0xff] %v371
          %436 = vst [vmem:[#allocation2 + $0x48] sm:$0xff] %v372
          %437 = vst [vmem:[#allocation2 + $0x50] sm:$0xff] %v373
          %438 = vst [vmem:[#allocation2 + $0x58] sm:$0xff] %v374
          %439 = vst [vmem:[#allocation2 + $0x60] sm:$0xff] %v375
          %440 = vst [vmem:[#allocation2 + $0x68] sm:$0xff] %v376
          %441 = vst [vmem:[#allocation2 + $0x70] sm:$0xff] %v377
          %442 = vst [vmem:[#allocation2 + $0x78] sm:$0xff] %v378
          %443 = vst [vmem:[#allocation2 + $0x80] sm:$0xff] %v379
          %444 = vst [vmem:[#allocation2 + $0x88] sm:$0xff] %v380
          %445 = vst [vmem:[#allocation2 + $0x90] sm:$0xff] %v381
          %446 = vst [vmem:[#allocation2 + $0x98] sm:$0xff] %v382
          %447 = vst [vmem:[#allocation2 + $0xa0] sm:$0xff] %v383
          %448 = vst [vmem:[#allocation2 + $0xa8] sm:$0xff] %v384
          %449 = vst [vmem:[#allocation2 + $0xb0] sm:$0xff] %v385
          %450 = vst [vmem:[#allocation2 + $0xb8] sm:$0xff] %v386
          %451 = vst [vmem:[#allocation2 + $0xc0] sm:$0xff] %v387
          %452 = vst [vmem:[#allocation2 + $0xc8] sm:$0xff] %v388
          %453 = vst [vmem:[#allocation2 + $0xd0] sm:$0xff] %v389
          %454 = vst [vmem:[#allocation2 + $0xd8] sm:$0xff] %v390
          %455 = vst [vmem:[#allocation2 + $0xe0] sm:$0xff] %v391
          %456 = vst [vmem:[#allocation2 + $0xe8] sm:$0xff] %v392
          %457 = vst [vmem:[#allocation2 + $0xf0] sm:$0xff] %v393
          %458 = vst [vmem:[#allocation2 + $0xf8] sm:$0xff] %v394
          %459 = vst [vmem:[#allocation2 + $0x100] sm:$0xff] %v395
          %460 = vst [vmem:[#allocation2 + $0x108] sm:$0xff] %v396
          %461 = vst [vmem:[#allocation2 + $0x110] sm:$0xff] %v397
          %462 = vst [vmem:[#allocation2 + $0x118] sm:$0xff] %v398
          %463 = vst [vmem:[#allocation2 + $0x120] sm:$0xff] %v399
          %464 = vst [vmem:[#allocation2 + $0x128] sm:$0xff] %v400
          %465 = vst [vmem:[#allocation2 + $0x130] sm:$0xff] %v401
          %466 = vst [vmem:[#allocation2 + $0x138] sm:$0xff] %v402
          %467 = vst [vmem:[#allocation2 + $0x140] sm:$0xff] %v403
          %468 = vst [vmem:[#allocation2 + $0x148] sm:$0xff] %v404
          %469 = vst [vmem:[#allocation2 + $0x150] sm:$0xff] %v405
          %470 = vst [vmem:[#allocation2 + $0x158] sm:$0xff] %v406
          %471 = vst [vmem:[#allocation2 + $0x160] sm:$0xff] %v407
          %472 = vst [vmem:[#allocation2 + $0x168] sm:$0xff] %v408
          %473 = vst [vmem:[#allocation2 + $0x170] sm:$0xff] %v409
          %474 = vst [vmem:[#allocation2 + $0x178] sm:$0xff] %v410
          %475 = vst [vmem:[#allocation2 + $0x180] sm:$0xff] %v411
          %476 = vst [vmem:[#allocation2 + $0x188] sm:$0xff] %v412
          %477 = vst [vmem:[#allocation2 + $0x190] sm:$0xff] %v413
          %478 = vst [vmem:[#allocation2 + $0x198] sm:$0xff] %v414
          %479 = vst [vmem:[#allocation2 + $0x1a0] sm:$0xff] %v415
          %480 = vst [vmem:[#allocation2 + $0x1a8] sm:$0xff] %v416
          %481 = vst [vmem:[#allocation2 + $0x1b0] sm:$0xff] %v417
          %482 = vst [vmem:[#allocation2 + $0x1b8] sm:$0xff] %v418
          %483 = vst [vmem:[#allocation2 + $0x1c0] sm:$0xff] %v419
          %484 = vst [vmem:[#allocation2 + $0x1c8] sm:$0xff] %v420
          %485 = vst [vmem:[#allocation2 + $0x1d0] sm:$0xff] %v421
          %486 = vst [vmem:[#allocation2 + $0x1d8] sm:$0xff] %v422
          %487 = vst [vmem:[#allocation2 + $0x1e0] sm:$0xff] %v423
          %488 = vst [vmem:[#allocation2 + $0x1e8] sm:$0xff] %v424
          %489 = vst [vmem:[#allocation2 + $0x1f0] sm:$0xff] %v425
          %490 = vst [vmem:[#allocation2 + $0x1f8] sm:$0xff] %v426
        $region68: #{tpu_custom_call.1} parent=43 // pred_fallthru
          _
        %v491 = vld [vmem:[#allocation2] sm:$0xff]
        %v492 = vld [vmem:[#allocation2 + $0x8] sm:$0xff]
        %v493 = vld [vmem:[#allocation2 + $0x10] sm:$0xff]
        %v494 = vld [vmem:[#allocation2 + $0x18] sm:$0xff]
        %v495 = vld [vmem:[#allocation2 + $0x20] sm:$0xff]
        %v496 = vld [vmem:[#allocation2 + $0x28] sm:$0xff]
        %v497 = vld [vmem:[#allocation2 + $0x30] sm:$0xff]
        %v498 = vld [vmem:[#allocation2 + $0x38] sm:$0xff]
        %v499 = vld [vmem:[#allocation2 + $0x40] sm:$0xff]
        %v500 = vld [vmem:[#allocation2 + $0x48] sm:$0xff]
        %v501 = vld [vmem:[#allocation2 + $0x50] sm:$0xff]
        %v502 = vld [vmem:[#allocation2 + $0x58] sm:$0xff]
        %v503 = vld [vmem:[#allocation2 + $0x60] sm:$0xff]
        %v504 = vld [vmem:[#allocation2 + $0x68] sm:$0xff]
        %v505 = vld [vmem:[#allocation2 + $0x70] sm:$0xff]
        %v506 = vld [vmem:[#allocation2 + $0x78] sm:$0xff]
        %v507 = vld [vmem:[#allocation2 + $0x80] sm:$0xff]
        %v508 = vld [vmem:[#allocation2 + $0x88] sm:$0xff]
        %v509 = vld [vmem:[#allocation2 + $0x90] sm:$0xff]
        %v510 = vld [vmem:[#allocation2 + $0x98] sm:$0xff]
        %v511 = vld [vmem:[#allocation2 + $0xa0] sm:$0xff]
        %v512 = vld [vmem:[#allocation2 + $0xa8] sm:$0xff]
        %v513 = vld [vmem:[#allocation2 + $0xb0] sm:$0xff]
        %v514 = vld [vmem:[#allocation2 + $0xb8] sm:$0xff]
        %v515 = vld [vmem:[#allocation2 + $0xc0] sm:$0xff]
        %v516 = vld [vmem:[#allocation2 + $0xc8] sm:$0xff]
        %v517 = vld [vmem:[#allocation2 + $0xd0] sm:$0xff]
        %v518 = vld [vmem:[#allocation2 + $0xd8] sm:$0xff]
        %v519 = vld [vmem:[#allocation2 + $0xe0] sm:$0xff]
        %v520 = vld [vmem:[#allocation2 + $0xe8] sm:$0xff]
        %v521 = vld [vmem:[#allocation2 + $0xf0] sm:$0xff]
        %v522 = vld [vmem:[#allocation2 + $0xf8] sm:$0xff]
        %v523 = vld [vmem:[#allocation2 + $0x100] sm:$0xff]
        %v524 = vld [vmem:[#allocation2 + $0x108] sm:$0xff]
        %v525 = vld [vmem:[#allocation2 + $0x110] sm:$0xff]
        %v526 = vld [vmem:[#allocation2 + $0x118] sm:$0xff]
        %v527 = vld [vmem:[#allocation2 + $0x120] sm:$0xff]
        %v528 = vld [vmem:[#allocation2 + $0x128] sm:$0xff]
        %v529 = vld [vmem:[#allocation2 + $0x130] sm:$0xff]
        %v530 = vld [vmem:[#allocation2 + $0x138] sm:$0xff]
        %v531 = vld [vmem:[#allocation2 + $0x140] sm:$0xff]
        %v532 = vld [vmem:[#allocation2 + $0x148] sm:$0xff]
        %v533 = vld [vmem:[#allocation2 + $0x150] sm:$0xff]
        %v534 = vld [vmem:[#allocation2 + $0x158] sm:$0xff]
        %v535 = vld [vmem:[#allocation2 + $0x160] sm:$0xff]
        %v536 = vld [vmem:[#allocation2 + $0x168] sm:$0xff]
        %v537 = vld [vmem:[#allocation2 + $0x170] sm:$0xff]
        %v538 = vld [vmem:[#allocation2 + $0x178] sm:$0xff]
        %v539 = vld [vmem:[#allocation2 + $0x180] sm:$0xff]
        %v540 = vld [vmem:[#allocation2 + $0x188] sm:$0xff]
        %v541 = vld [vmem:[#allocation2 + $0x190] sm:$0xff]
        %v542 = vld [vmem:[#allocation2 + $0x198] sm:$0xff]
        %v543 = vld [vmem:[#allocation2 + $0x1a0] sm:$0xff]
        %v544 = vld [vmem:[#allocation2 + $0x1a8] sm:$0xff]
        %v545 = vld [vmem:[#allocation2 + $0x1b0] sm:$0xff]
        %v546 = vld [vmem:[#allocation2 + $0x1b8] sm:$0xff]
        %v547 = vld [vmem:[#allocation2 + $0x1c0] sm:$0xff]
        %v548 = vld [vmem:[#allocation2 + $0x1c8] sm:$0xff]
        %v549 = vld [vmem:[#allocation2 + $0x1d0] sm:$0xff]
        %v550 = vld [vmem:[#allocation2 + $0x1d8] sm:$0xff]
        %v551 = vld [vmem:[#allocation2 + $0x1e0] sm:$0xff]
        %v552 = vld [vmem:[#allocation2 + $0x1e8] sm:$0xff]
        %v553 = vld [vmem:[#allocation2 + $0x1f0] sm:$0xff]
        %v554 = vld [vmem:[#allocation2 + $0x1f8] sm:$0xff]
        %v555 = vld [vmem:[%s303] sm:$0xff]
        %v556 = vld [vmem:[%s303 + $0x8] sm:$0xff]
        %v557 = vld [vmem:[%s303 + $0x10] sm:$0xff]
        %v558 = vld [vmem:[%s303 + $0x18] sm:$0xff]
        %v559 = vld [vmem:[%s303 + $0x20] sm:$0xff]
        %v560 = vld [vmem:[%s303 + $0x28] sm:$0xff]
        %v561 = vld [vmem:[%s303 + $0x30] sm:$0xff]
        %v562 = vld [vmem:[%s303 + $0x38] sm:$0xff]
        %v563 = vld [vmem:[%s303 + $0x40] sm:$0xff]
        %v564 = vld [vmem:[%s303 + $0x48] sm:$0xff]
        %v565 = vld [vmem:[%s303 + $0x50] sm:$0xff]
        %v566 = vld [vmem:[%s303 + $0x58] sm:$0xff]
        %v567 = vld [vmem:[%s303 + $0x60] sm:$0xff]
        %v568 = vld [vmem:[%s303 + $0x68] sm:$0xff]
        %v569 = vld [vmem:[%s303 + $0x70] sm:$0xff]
        %v570 = vld [vmem:[%s303 + $0x78] sm:$0xff]
        %v571 = vld [vmem:[%s303 + $0x80] sm:$0xff]
        %v572 = vld [vmem:[%s303 + $0x88] sm:$0xff]
        %v573 = vld [vmem:[%s303 + $0x90] sm:$0xff]
        %v574 = vld [vmem:[%s303 + $0x98] sm:$0xff]
        %v575 = vld [vmem:[%s303 + $0xa0] sm:$0xff]
        %v576 = vld [vmem:[%s303 + $0xa8] sm:$0xff]
        %v577 = vld [vmem:[%s303 + $0xb0] sm:$0xff]
        %v578 = vld [vmem:[%s303 + $0xb8] sm:$0xff]
        %v579 = vld [vmem:[%s303 + $0xc0] sm:$0xff]
        %v580 = vld [vmem:[%s303 + $0xc8] sm:$0xff]
        %v581 = vld [vmem:[%s303 + $0xd0] sm:$0xff]
        %v582 = vld [vmem:[%s303 + $0xd8] sm:$0xff]
        %v583 = vld [vmem:[%s303 + $0xe0] sm:$0xff]
        %v584 = vld [vmem:[%s303 + $0xe8] sm:$0xff]
        %v585 = vld [vmem:[%s303 + $0xf0] sm:$0xff]
        %v586 = vld [vmem:[%s303 + $0xf8] sm:$0xff]
        %v587 = vld [vmem:[%s303 + $0x100] sm:$0xff]
        %v588 = vld [vmem:[%s303 + $0x108] sm:$0xff]
        %v589 = vld [vmem:[%s303 + $0x110] sm:$0xff]
        %v590 = vld [vmem:[%s303 + $0x118] sm:$0xff]
        %v591 = vld [vmem:[%s303 + $0x120] sm:$0xff]
        %v592 = vld [vmem:[%s303 + $0x128] sm:$0xff]
        %v593 = vld [vmem:[%s303 + $0x130] sm:$0xff]
        %v594 = vld [vmem:[%s303 + $0x138] sm:$0xff]
        %v595 = vld [vmem:[%s303 + $0x140] sm:$0xff]
        %v596 = vld [vmem:[%s303 + $0x148] sm:$0xff]
        %v597 = vld [vmem:[%s303 + $0x150] sm:$0xff]
        %v598 = vld [vmem:[%s303 + $0x158] sm:$0xff]
        %v599 = vld [vmem:[%s303 + $0x160] sm:$0xff]
        %v600 = vld [vmem:[%s303 + $0x168] sm:$0xff]
        %v601 = vld [vmem:[%s303 + $0x170] sm:$0xff]
        %v602 = vld [vmem:[%s303 + $0x178] sm:$0xff]
        %v603 = vld [vmem:[%s303 + $0x180] sm:$0xff]
        %v604 = vld [vmem:[%s303 + $0x188] sm:$0xff]
        %v605 = vld [vmem:[%s303 + $0x190] sm:$0xff]
        %v606 = vld [vmem:[%s303 + $0x198] sm:$0xff]
        %v607 = vld [vmem:[%s303 + $0x1a0] sm:$0xff]
        %v608 = vld [vmem:[%s303 + $0x1a8] sm:$0xff]
        %v609 = vld [vmem:[%s303 + $0x1b0] sm:$0xff]
        %v610 = vld [vmem:[%s303 + $0x1b8] sm:$0xff]
        %v611 = vld [vmem:[%s303 + $0x1c0] sm:$0xff]
        %v612 = vld [vmem:[%s303 + $0x1c8] sm:$0xff]
        %v613 = vld [vmem:[%s303 + $0x1d0] sm:$0xff]
        %v614 = vld [vmem:[%s303 + $0x1d8] sm:$0xff]
        %v615 = vld [vmem:[%s303 + $0x1e0] sm:$0xff]
        %v616 = vld [vmem:[%s303 + $0x1e8] sm:$0xff]
        %v617 = vld [vmem:[%s303 + $0x1f0] sm:$0xff]
        %v618 = vld [vmem:[%s303 + $0x1f8] sm:$0xff]
        %v619 = vld [vmem:[%s303 + $0x200] sm:$0xff]
        %v620 = vld [vmem:[%s303 + $0x208] sm:$0xff]
        %v621 = vld [vmem:[%s303 + $0x210] sm:$0xff]
        %v622 = vld [vmem:[%s303 + $0x218] sm:$0xff]
        %v623 = vld [vmem:[%s303 + $0x220] sm:$0xff]
        %v624 = vld [vmem:[%s303 + $0x228] sm:$0xff]
        %v625 = vld [vmem:[%s303 + $0x230] sm:$0xff]
        %v626 = vld [vmem:[%s303 + $0x238] sm:$0xff]
        %v627 = vld [vmem:[%s303 + $0x240] sm:$0xff]
        %v628 = vld [vmem:[%s303 + $0x248] sm:$0xff]
        %v629 = vld [vmem:[%s303 + $0x250] sm:$0xff]
        %v630 = vld [vmem:[%s303 + $0x258] sm:$0xff]
        %v631 = vld [vmem:[%s303 + $0x260] sm:$0xff]
        %v632 = vld [vmem:[%s303 + $0x268] sm:$0xff]
        %v633 = vld [vmem:[%s303 + $0x270] sm:$0xff]
        %v634 = vld [vmem:[%s303 + $0x278] sm:$0xff]
        %v635 = vld [vmem:[%s303 + $0x280] sm:$0xff]
        %v636 = vld [vmem:[%s303 + $0x288] sm:$0xff]
        %v637 = vld [vmem:[%s303 + $0x290] sm:$0xff]
        %v638 = vld [vmem:[%s303 + $0x298] sm:$0xff]
        %v639 = vld [vmem:[%s303 + $0x2a0] sm:$0xff]
        %v640 = vld [vmem:[%s303 + $0x2a8] sm:$0xff]
        %v641 = vld [vmem:[%s303 + $0x2b0] sm:$0xff]
        %v642 = vld [vmem:[%s303 + $0x2b8] sm:$0xff]
        %v643 = vld [vmem:[%s303 + $0x2c0] sm:$0xff]
        %v644 = vld [vmem:[%s303 + $0x2c8] sm:$0xff]
        %v645 = vld [vmem:[%s303 + $0x2d0] sm:$0xff]
        %v646 = vld [vmem:[%s303 + $0x2d8] sm:$0xff]
        %v647 = vld [vmem:[%s303 + $0x2e0] sm:$0xff]
        %v648 = vld [vmem:[%s303 + $0x2e8] sm:$0xff]
        %v649 = vld [vmem:[%s303 + $0x2f0] sm:$0xff]
        %v650 = vld [vmem:[%s303 + $0x2f8] sm:$0xff]
        %v651 = vld [vmem:[%s303 + $0x300] sm:$0xff]
        %v652 = vld [vmem:[%s303 + $0x308] sm:$0xff]
        %v653 = vld [vmem:[%s303 + $0x310] sm:$0xff]
        %v654 = vld [vmem:[%s303 + $0x318] sm:$0xff]
        %v655 = vld [vmem:[%s303 + $0x320] sm:$0xff]
        %v656 = vld [vmem:[%s303 + $0x328] sm:$0xff]
        %v657 = vld [vmem:[%s303 + $0x330] sm:$0xff]
        %v658 = vld [vmem:[%s303 + $0x338] sm:$0xff]
        %v659 = vld [vmem:[%s303 + $0x340] sm:$0xff]
        %v660 = vld [vmem:[%s303 + $0x348] sm:$0xff]
        %v661 = vld [vmem:[%s303 + $0x350] sm:$0xff]
        %v662 = vld [vmem:[%s303 + $0x358] sm:$0xff]
        %v663 = vld [vmem:[%s303 + $0x360] sm:$0xff]
        %v664 = vld [vmem:[%s303 + $0x368] sm:$0xff]
        %v665 = vld [vmem:[%s303 + $0x370] sm:$0xff]
        %v666 = vld [vmem:[%s303 + $0x378] sm:$0xff]
        %v667 = vld [vmem:[%s303 + $0x380] sm:$0xff]
        %v668 = vld [vmem:[%s303 + $0x388] sm:$0xff]
        %v669 = vld [vmem:[%s303 + $0x390] sm:$0xff]
        %v670 = vld [vmem:[%s303 + $0x398] sm:$0xff]
        %v671 = vld [vmem:[%s303 + $0x3a0] sm:$0xff]
        %v672 = vld [vmem:[%s303 + $0x3a8] sm:$0xff]
        %v673 = vld [vmem:[%s303 + $0x3b0] sm:$0xff]
        %v674 = vld [vmem:[%s303 + $0x3b8] sm:$0xff]
        %v675 = vld [vmem:[%s303 + $0x3c0] sm:$0xff]
        %v676 = vld [vmem:[%s303 + $0x3c8] sm:$0xff]
        %v677 = vld [vmem:[%s303 + $0x3d0] sm:$0xff]
        %v678 = vld [vmem:[%s303 + $0x3d8] sm:$0xff]
        %v679 = vld [vmem:[%s303 + $0x3e0] sm:$0xff]
        %v680 = vld [vmem:[%s303 + $0x3e8] sm:$0xff]
        %v681 = vld [vmem:[%s303 + $0x3f0] sm:$0xff]
        %v682 = vld [vmem:[%s303 + $0x3f8] sm:$0xff]
        %v683 = vld [vmem:[%s303 + $0x400] sm:$0xff]
        %v684 = vld [vmem:[%s303 + $0x408] sm:$0xff]
        %v685 = vld [vmem:[%s303 + $0x410] sm:$0xff]
        %v686 = vld [vmem:[%s303 + $0x418] sm:$0xff]
        %v687 = vld [vmem:[%s303 + $0x420] sm:$0xff]
        %v688 = vld [vmem:[%s303 + $0x428] sm:$0xff]
        %v689 = vld [vmem:[%s303 + $0x430] sm:$0xff]
        %v690 = vld [vmem:[%s303 + $0x438] sm:$0xff]
        %v691 = vld [vmem:[%s303 + $0x440] sm:$0xff]
        %v692 = vld [vmem:[%s303 + $0x448] sm:$0xff]
        %v693 = vld [vmem:[%s303 + $0x450] sm:$0xff]
        %v694 = vld [vmem:[%s303 + $0x458] sm:$0xff]
        %v695 = vld [vmem:[%s303 + $0x460] sm:$0xff]
        %v696 = vld [vmem:[%s303 + $0x468] sm:$0xff]
        %v697 = vld [vmem:[%s303 + $0x470] sm:$0xff]
        %v698 = vld [vmem:[%s303 + $0x478] sm:$0xff]
        %v699 = vld [vmem:[%s303 + $0x480] sm:$0xff]
        %v700 = vld [vmem:[%s303 + $0x488] sm:$0xff]
        %v701 = vld [vmem:[%s303 + $0x490] sm:$0xff]
        %v702 = vld [vmem:[%s303 + $0x498] sm:$0xff]
        %v703 = vld [vmem:[%s303 + $0x4a0] sm:$0xff]
        %v704 = vld [vmem:[%s303 + $0x4a8] sm:$0xff]
        %v705 = vld [vmem:[%s303 + $0x4b0] sm:$0xff]
        %v706 = vld [vmem:[%s303 + $0x4b8] sm:$0xff]
        %v707 = vld [vmem:[%s303 + $0x4c0] sm:$0xff]
        %v708 = vld [vmem:[%s303 + $0x4c8] sm:$0xff]
        %v709 = vld [vmem:[%s303 + $0x4d0] sm:$0xff]
        %v710 = vld [vmem:[%s303 + $0x4d8] sm:$0xff]
        %v711 = vld [vmem:[%s303 + $0x4e0] sm:$0xff]
        %v712 = vld [vmem:[%s303 + $0x4e8] sm:$0xff]
        %v713 = vld [vmem:[%s303 + $0x4f0] sm:$0xff]
        %v714 = vld [vmem:[%s303 + $0x4f8] sm:$0xff]
        %v715 = vld [vmem:[%s303 + $0x500] sm:$0xff]
        %v716 = vld [vmem:[%s303 + $0x508] sm:$0xff]
        %v717 = vld [vmem:[%s303 + $0x510] sm:$0xff]
        %v718 = vld [vmem:[%s303 + $0x518] sm:$0xff]
        %v719 = vld [vmem:[%s303 + $0x520] sm:$0xff]
        %v720 = vld [vmem:[%s303 + $0x528] sm:$0xff]
        %v721 = vld [vmem:[%s303 + $0x530] sm:$0xff]
        %v722 = vld [vmem:[%s303 + $0x538] sm:$0xff]
        %v723 = vld [vmem:[%s303 + $0x540] sm:$0xff]
        %v724 = vld [vmem:[%s303 + $0x548] sm:$0xff]
        %v725 = vld [vmem:[%s303 + $0x550] sm:$0xff]
        %v726 = vld [vmem:[%s303 + $0x558] sm:$0xff]
        %v727 = vld [vmem:[%s303 + $0x560] sm:$0xff]
        %v728 = vld [vmem:[%s303 + $0x568] sm:$0xff]
        %v729 = vld [vmem:[%s303 + $0x570] sm:$0xff]
        %v730 = vld [vmem:[%s303 + $0x578] sm:$0xff]
        %v731 = vld [vmem:[%s303 + $0x580] sm:$0xff]
        %v732 = vld [vmem:[%s303 + $0x588] sm:$0xff]
        %v733 = vld [vmem:[%s303 + $0x590] sm:$0xff]
        %v734 = vld [vmem:[%s303 + $0x598] sm:$0xff]
        %v735 = vld [vmem:[%s303 + $0x5a0] sm:$0xff]
        %v736 = vld [vmem:[%s303 + $0x5a8] sm:$0xff]
        %v737 = vld [vmem:[%s303 + $0x5b0] sm:$0xff]
        %v738 = vld [vmem:[%s303 + $0x5b8] sm:$0xff]
        %v739 = vld [vmem:[%s303 + $0x5c0] sm:$0xff]
        %v740 = vld [vmem:[%s303 + $0x5c8] sm:$0xff]
        %v741 = vld [vmem:[%s303 + $0x5d0] sm:$0xff]
        %v742 = vld [vmem:[%s303 + $0x5d8] sm:$0xff]
        %v743 = vld [vmem:[%s303 + $0x5e0] sm:$0xff]
        %v744 = vld [vmem:[%s303 + $0x5e8] sm:$0xff]
        %v745 = vld [vmem:[%s303 + $0x5f0] sm:$0xff]
        %v746 = vld [vmem:[%s303 + $0x5f8] sm:$0xff]
        %v747 = vld [vmem:[%s303 + $0x600] sm:$0xff]
        %v748 = vld [vmem:[%s303 + $0x608] sm:$0xff]
        %v749 = vld [vmem:[%s303 + $0x610] sm:$0xff]
        %v750 = vld [vmem:[%s303 + $0x618] sm:$0xff]
        %v751 = vld [vmem:[%s303 + $0x620] sm:$0xff]
        %v752 = vld [vmem:[%s303 + $0x628] sm:$0xff]
        %v753 = vld [vmem:[%s303 + $0x630] sm:$0xff]
        %v754 = vld [vmem:[%s303 + $0x638] sm:$0xff]
        %v755 = vld [vmem:[%s303 + $0x640] sm:$0xff]
        %v756 = vld [vmem:[%s303 + $0x648] sm:$0xff]
        %v757 = vld [vmem:[%s303 + $0x650] sm:$0xff]
        %v758 = vld [vmem:[%s303 + $0x658] sm:$0xff]
        %v759 = vld [vmem:[%s303 + $0x660] sm:$0xff]
        %v760 = vld [vmem:[%s303 + $0x668] sm:$0xff]
        %v761 = vld [vmem:[%s303 + $0x670] sm:$0xff]
        %v762 = vld [vmem:[%s303 + $0x678] sm:$0xff]
        %v763 = vld [vmem:[%s303 + $0x680] sm:$0xff]
        %v764 = vld [vmem:[%s303 + $0x688] sm:$0xff]
        %v765 = vld [vmem:[%s303 + $0x690] sm:$0xff]
        %v766 = vld [vmem:[%s303 + $0x698] sm:$0xff]
        %v767 = vld [vmem:[%s303 + $0x6a0] sm:$0xff]
        %v768 = vld [vmem:[%s303 + $0x6a8] sm:$0xff]
        %v769 = vld [vmem:[%s303 + $0x6b0] sm:$0xff]
        %v770 = vld [vmem:[%s303 + $0x6b8] sm:$0xff]
        %v771 = vld [vmem:[%s303 + $0x6c0] sm:$0xff]
        %v772 = vld [vmem:[%s303 + $0x6c8] sm:$0xff]
        %v773 = vld [vmem:[%s303 + $0x6d0] sm:$0xff]
        %v774 = vld [vmem:[%s303 + $0x6d8] sm:$0xff]
        %v775 = vld [vmem:[%s303 + $0x6e0] sm:$0xff]
        %v776 = vld [vmem:[%s303 + $0x6e8] sm:$0xff]
        %v777 = vld [vmem:[%s303 + $0x6f0] sm:$0xff]
        %v778 = vld [vmem:[%s303 + $0x6f8] sm:$0xff]
        %v779 = vld [vmem:[%s303 + $0x700] sm:$0xff]
        %v780 = vld [vmem:[%s303 + $0x708] sm:$0xff]
        %v781 = vld [vmem:[%s303 + $0x710] sm:$0xff]
        %v782 = vld [vmem:[%s303 + $0x718] sm:$0xff]
        %v783 = vld [vmem:[%s303 + $0x720] sm:$0xff]
        %v784 = vld [vmem:[%s303 + $0x728] sm:$0xff]
        %v785 = vld [vmem:[%s303 + $0x730] sm:$0xff]
        %v786 = vld [vmem:[%s303 + $0x738] sm:$0xff]
        %v787 = vld [vmem:[%s303 + $0x740] sm:$0xff]
        %v788 = vld [vmem:[%s303 + $0x748] sm:$0xff]
        %v789 = vld [vmem:[%s303 + $0x750] sm:$0xff]
        %v790 = vld [vmem:[%s303 + $0x758] sm:$0xff]
        %v791 = vld [vmem:[%s303 + $0x760] sm:$0xff]
        %v792 = vld [vmem:[%s303 + $0x768] sm:$0xff]
        %v793 = vld [vmem:[%s303 + $0x770] sm:$0xff]
        %v794 = vld [vmem:[%s303 + $0x778] sm:$0xff]
        %v795 = vld [vmem:[%s303 + $0x780] sm:$0xff]
        %v796 = vld [vmem:[%s303 + $0x788] sm:$0xff]
        %v797 = vld [vmem:[%s303 + $0x790] sm:$0xff]
        %v798 = vld [vmem:[%s303 + $0x798] sm:$0xff]
        %v799 = vld [vmem:[%s303 + $0x7a0] sm:$0xff]
        %v800 = vld [vmem:[%s303 + $0x7a8] sm:$0xff]
        %v801 = vld [vmem:[%s303 + $0x7b0] sm:$0xff]
        %v802 = vld [vmem:[%s303 + $0x7b8] sm:$0xff]
        %v803 = vld [vmem:[%s303 + $0x7c0] sm:$0xff]
        %v804 = vld [vmem:[%s303 + $0x7c8] sm:$0xff]
        %v805 = vld [vmem:[%s303 + $0x7d0] sm:$0xff]
        %v806 = vld [vmem:[%s303 + $0x7d8] sm:$0xff]
        %v807 = vld [vmem:[%s303 + $0x7e0] sm:$0xff]
        %v808 = vld [vmem:[%s303 + $0x7e8] sm:$0xff]
        %v809 = vld [vmem:[%s303 + $0x7f0] sm:$0xff]
        %v810 = vld [vmem:[%s303 + $0x7f8] sm:$0xff]
        %811 = vmatprep.subr.mxu0 %v556
        %812 = vmatpush1.msra.mxu0 %v555
        %813 = vmatprep.subr.mxu0 %v560
        %814 = vmatpush1.msra.mxu0 %v559
        %815 = vmatprep.subr.mxu0 %v564
        %816 = vmatpush1.msra.mxu0 %v563
        %817 = vmatprep.subr.mxu0 %v568
        %818 = vmatpush1.msra.mxu0 %v567
        %819 = vmatprep.subr.mxu0 %v572
        %820 = vmatpush1.msra.mxu0 %v571
        %821 = vmatprep.subr.mxu0 %v576
        %822 = vmatpush1.msra.mxu0 %v575
        %823 = vmatprep.subr.mxu0 %v580
        %824 = vmatpush1.msra.mxu0 %v579
        %825 = vmatprep.subr.mxu0 %v584
        %826 = vmatpush1.msra.mxu0 %v583
        %827 = vmatprep.subr.mxu0 %v588
        %828 = vmatpush1.msra.mxu0 %v587
        %829 = vmatprep.subr.mxu0 %v592
        %830 = vmatpush1.msra.mxu0 %v591
        %831 = vmatprep.subr.mxu0 %v596
        %832 = vmatpush1.msra.mxu0 %v595
        %833 = vmatprep.subr.mxu0 %v600
        %834 = vmatpush1.msra.mxu0 %v599
        %835 = vmatprep.subr.mxu0 %v604
        %836 = vmatpush1.msra.mxu0 %v603
        %837 = vmatprep.subr.mxu0 %v608
        %838 = vmatpush1.msra.mxu0 %v607
        %839 = vmatprep.subr.mxu0 %v612
        %840 = vmatpush1.msra.mxu0 %v611
        %841 = vmatprep.subr.mxu0 %v616
        %842 = vmatpush1.msra.mxu0 %v615
        %843 = vmatprep.subr.mxu0 %v620
        %844 = vmatpush1.msra.mxu0 %v619
        %845 = vmatprep.subr.mxu0 %v624
        %846 = vmatpush1.msra.mxu0 %v623
        %847 = vmatprep.subr.mxu0 %v628
        %848 = vmatpush1.msra.mxu0 %v627
        %849 = vmatprep.subr.mxu0 %v632
        %850 = vmatpush1.msra.mxu0 %v631
        %851 = vmatprep.subr.mxu0 %v636
        %852 = vmatpush1.msra.mxu0 %v635
        %853 = vmatprep.subr.mxu0 %v640
        %854 = vmatpush1.msra.mxu0 %v639
        %855 = vmatprep.subr.mxu0 %v644
        %856 = vmatpush1.msra.mxu0 %v643
        %857 = vmatprep.subr.mxu0 %v648
        %858 = vmatpush1.msra.mxu0 %v647
        %859 = vmatprep.subr.mxu0 %v652
        %860 = vmatpush1.msra.mxu0 %v651
        %861 = vmatprep.subr.mxu0 %v656
        %862 = vmatpush1.msra.mxu0 %v655
        %863 = vmatprep.subr.mxu0 %v660
        %864 = vmatpush1.msra.mxu0 %v659
        %865 = vmatprep.subr.mxu0 %v664
        %866 = vmatpush1.msra.mxu0 %v663
        %867 = vmatprep.subr.mxu0 %v668
        %868 = vmatpush1.msra.mxu0 %v667
        %869 = vmatprep.subr.mxu0 %v672
        %870 = vmatpush1.msra.mxu0 %v671
        %871 = vmatprep.subr.mxu0 %v676
        %872 = vmatpush1.msra.mxu0 %v675
        %873 = vmatprep.subr.mxu0 %v680
        %874 = vmatpush1.msra.mxu0 %v679
        %875 = vmatprep.mubr.f32.mxu0 %v492
        %876 = vmatmul.mubr.f32.gmra.mrb[0].mxu0 %v491
        %v877 = vpop.f32.mrb[0].mxu0
        %v878 = vadd.f32 0.0, %v877
        %v879 = vpop.f32.mrb[0].mxu0
        %v880 = vadd.f32 0.0, %v879
        %881 = vmatprep.mubr.f32.mxu0 %v496
        %882 = vmatmul.mubr.f32.gmra.mrb[0].mxu0 %v495
        %v883 = vpop.f32.mrb[0].mxu0
        %v884 = vadd.f32 0.0, %v883
        %v885 = vpop.f32.mrb[0].mxu0
        %v886 = vadd.f32 0.0, %v885
        %887 = vmatprep.mubr.f32.mxu0 %v500
        %888 = vmatmul.mubr.f32.gmra.mrb[0].mxu0 %v499
        %v889 = vpop.f32.mrb[0].mxu0
        %v890 = vadd.f32 0.0, %v889
        %v891 = vpop.f32.mrb[0].mxu0
        %v892 = vadd.f32 0.0, %v891
        %893 = vmatprep.mubr.f32.mxu0 %v504
        %894 = vmatmul.mubr.f32.gmra.mrb[0].mxu0 %v503
        %v895 = vpop.f32.mrb[0].mxu0
        %v896 = vadd.f32 0.0, %v895
        %v897 = vpop.f32.mrb[0].mxu0
        %v898 = vadd.f32 0.0, %v897
        %899 = vmatprep.mubr.f32.mxu0 %v508
        %900 = vmatmul.mubr.f32.gmra.mrb[0].mxu0 %v507
        %v901 = vpop.f32.mrb[0].mxu0
        %v902 = vadd.f32 0.0, %v901
        %v903 = vpop.f32.mrb[0].mxu0
        %v904 = vadd.f32 0.0, %v903
        %905 = vmatprep.mubr.f32.mxu0 %v512
        %906 = vmatmul.mubr.f32.gmra.mrb[0].mxu0 %v511
        %v907 = vpop.f32.mrb[0].mxu0
        %v908 = vadd.f32 0.0, %v907
        %v909 = vpop.f32.mrb[0].mxu0
        %v910 = vadd.f32 0.0, %v909
        %911 = vmatprep.mubr.f32.mxu0 %v516
        %912 = vmatmul.mubr.f32.gmra.mrb[0].mxu0 %v515
        %v913 = vpop.f32.mrb[0].mxu0
        %v914 = vadd.f32 0.0, %v913
        %v915 = vpop.f32.mrb[0].mxu0
        %v916 = vadd.f32 0.0, %v915
        %917 = vmatprep.mubr.f32.mxu0 %v520
        %918 = vmatmul.mubr.f32.gmra.mrb[0].mxu0 %v519
        %v919 = vpop.f32.mrb[0].mxu0
        %v920 = vadd.f32 0.0, %v919
        %v921 = vpop.f32.mrb[0].mxu0
        %v922 = vadd.f32 0.0, %v921
        %923 = vmatprep.mubr.f32.mxu0 %v524
        %924 = vmatmul.mubr.f32.gmra.mrb[0].mxu0 %v523
        %v925 = vpop.f32.mrb[0].mxu0
        %v926 = vadd.f32 0.0, %v925
        %v927 = vpop.f32.mrb[0].mxu0
        %v928 = vadd.f32 0.0, %v927
        %929 = vmatprep.mubr.f32.mxu0 %v528
        %930 = vmatmul.mubr.f32.gmra.mrb[0].mxu0 %v527
        %v931 = vpop.f32.mrb[0].mxu0
        %v932 = vadd.f32 0.0, %v931
        %v933 = vpop.f32.mrb[0].mxu0
        %v934 = vadd.f32 0.0, %v933
        %935 = vmatprep.mubr.f32.mxu0 %v532
        %936 = vmatmul.mubr.f32.gmra.mrb[0].mxu0 %v531
        %v937 = vpop.f32.mrb[0].mxu0
        %v938 = vadd.f32 0.0, %v937
        %v939 = vpop.f32.mrb[0].mxu0
        %v940 = vadd.f32 0.0, %v939
        %941 = vmatprep.mubr.f32.mxu0 %v536
        %942 = vmatmul.mubr.f32.gmra.mrb[0].mxu0 %v535
        %v943 = vpop.f32.mrb[0].mxu0
        %v944 = vadd.f32 0.0, %v943
        %v945 = vpop.f32.mrb[0].mxu0
        %v946 = vadd.f32 0.0, %v945
        %947 = vmatprep.mubr.f32.mxu0 %v540
        %948 = vmatmul.mubr.f32.gmra.mrb[0].mxu0 %v539
        %v949 = vpop.f32.mrb[0].mxu0
        %v950 = vadd.f32 0.0, %v949
        %v951 = vpop.f32.mrb[0].mxu0
        %v952 = vadd.f32 0.0, %v951
        %953 = vmatprep.mubr.f32.mxu0 %v544
        %954 = vmatmul.mubr.f32.gmra.mrb[0].mxu0 %v543
        %v955 = vpop.f32.mrb[0].mxu0
        %v956 = vadd.f32 0.0, %v955
        %v957 = vpop.f32.mrb[0].mxu0
        %v958 = vadd.f32 0.0, %v957
        %959 = vmatprep.mubr.f32.mxu0 %v548
        %960 = vmatmul.mubr.f32.gmra.mrb[0].mxu0 %v547
        %v961 = vpop.f32.mrb[0].mxu0
        %v962 = vadd.f32 0.0, %v961
        %v963 = vpop.f32.mrb[0].mxu0
        %v964 = vadd.f32 0.0, %v963
        %965 = vmatprep.mubr.f32.mxu0 %v552
        %966 = vmatmul.mubr.f32.gmra.mrb[0].mxu0 %v551
        %v967 = vpop.f32.mrb[0].mxu0
        %v968 = vadd.f32 0.0, %v967
        %v969 = vpop.f32.mrb[0].mxu0
        %v970 = vadd.f32 0.0, %v969
        %971 = vdwg.mxu0
        %972 = vmatprep.subr.mxu0 %v684
        %973 = vmatpush1.msra.mxu0 %v683
        %974 = vmatprep.subr.mxu0 %v688
        %975 = vmatpush1.msra.mxu0 %v687
        %976 = vmatprep.subr.mxu0 %v692
        %977 = vmatpush1.msra.mxu0 %v691
        %978 = vmatprep.subr.mxu0 %v696
        %979 = vmatpush1.msra.mxu0 %v695
        %980 = vmatprep.subr.mxu0 %v700
        %981 = vmatpush1.msra.mxu0 %v699
        %982 = vmatprep.subr.mxu0 %v704
        %983 = vmatpush1.msra.mxu0 %v703
        %984 = vmatprep.subr.mxu0 %v708
        %985 = vmatpush1.msra.mxu0 %v707
        %986 = vmatprep.subr.mxu0 %v712
        %987 = vmatpush1.msra.mxu0 %v711
        %988 = vmatprep.subr.mxu0 %v716
        %989 = vmatpush1.msra.mxu0 %v715
        %990 = vmatprep.subr.mxu0 %v720
        %991 = vmatpush1.msra.mxu0 %v719
        %992 = vmatprep.subr.mxu0 %v724
        %993 = vmatpush1.msra.mxu0 %v723
        %994 = vmatprep.subr.mxu0 %v728
        %995 = vmatpush1.msra.mxu0 %v727
        %996 = vmatprep.subr.mxu0 %v732
        %997 = vmatpush1.msra.mxu0 %v731
        %998 = vmatprep.subr.mxu0 %v736
        %999 = vmatpush1.msra.mxu0 %v735
        %1000 = vmatprep.subr.mxu0 %v740
        %1001 = vmatpush1.msra.mxu0 %v739
        %1002 = vmatprep.subr.mxu0 %v744
        %1003 = vmatpush1.msra.mxu0 %v743
        %1004 = vmatprep.subr.mxu0 %v748
        %1005 = vmatpush1.msra.mxu0 %v747
        %1006 = vmatprep.subr.mxu0 %v752
        %1007 = vmatpush1.msra.mxu0 %v751
        %1008 = vmatprep.subr.mxu0 %v756
        %1009 = vmatpush1.msra.mxu0 %v755
        %1010 = vmatprep.subr.mxu0 %v760
        %1011 = vmatpush1.msra.mxu0 %v759
        %1012 = vmatprep.subr.mxu0 %v764
        %1013 = vmatpush1.msra.mxu0 %v763
        %1014 = vmatprep.subr.mxu0 %v768
        %1015 = vmatpush1.msra.mxu0 %v767
        %1016 = vmatprep.subr.mxu0 %v772
        %1017 = vmatpush1.msra.mxu0 %v771
        %1018 = vmatprep.subr.mxu0 %v776
        %1019 = vmatpush1.msra.mxu0 %v775
        %1020 = vmatprep.subr.mxu0 %v780
        %1021 = vmatpush1.msra.mxu0 %v779
        %1022 = vmatprep.subr.mxu0 %v784
        %1023 = vmatpush1.msra.mxu0 %v783
        %1024 = vmatprep.subr.mxu0 %v788
        %1025 = vmatpush1.msra.mxu0 %v787
        %1026 = vmatprep.subr.mxu0 %v792
        %1027 = vmatpush1.msra.mxu0 %v791
        %1028 = vmatprep.subr.mxu0 %v796
        %1029 = vmatpush1.msra.mxu0 %v795
        %1030 = vmatprep.subr.mxu0 %v800
        %1031 = vmatpush1.msra.mxu0 %v799
        %1032 = vmatprep.subr.mxu0 %v804
        %1033 = vmatpush1.msra.mxu0 %v803
        %1034 = vmatprep.subr.mxu0 %v808
        %1035 = vmatpush1.msra.mxu0 %v807
        %1036 = vmatprep.mubr.f32.mxu0 %v494
        %1037 = vmatmul.mubr.f32.gmra.mrb[0].mxu0 %v493
        %v1038 = vpop.f32.mrb[0].mxu0
        %v1039 = vadd.f32 %v878, %v1038
        %v1040 = vpop.f32.mrb[0].mxu0
        %v1041 = vadd.f32 %v880, %v1040
        %1042 = vmatprep.mubr.f32.mxu0 %v498
        %1043 = vmatmul.mubr.f32.gmra.mrb[0].mxu0 %v497
        %v1044 = vpop.f32.mrb[0].mxu0
        %v1045 = vadd.f32 %v884, %v1044
        %v1046 = vpop.f32.mrb[0].mxu0
        %v1047 = vadd.f32 %v886, %v1046
        %1048 = vmatprep.mubr.f32.mxu0 %v502
        %1049 = vmatmul.mubr.f32.gmra.mrb[0].mxu0 %v501
        %v1050 = vpop.f32.mrb[0].mxu0
        %v1051 = vadd.f32 %v890, %v1050
        %v1052 = vpop.f32.mrb[0].mxu0
        %v1053 = vadd.f32 %v892, %v1052
        %1054 = vmatprep.mubr.f32.mxu0 %v506
        %1055 = vmatmul.mubr.f32.gmra.mrb[0].mxu0 %v505
        %v1056 = vpop.f32.mrb[0].mxu0
        %v1057 = vadd.f32 %v896, %v1056
        %v1058 = vpop.f32.mrb[0].mxu0
        %v1059 = vadd.f32 %v898, %v1058
        %1060 = vmatprep.mubr.f32.mxu0 %v510
        %1061 = vmatmul.mubr.f32.gmra.mrb[0].mxu0 %v509
        %v1062 = vpop.f32.mrb[0].mxu0
        %v1063 = vadd.f32 %v902, %v1062
        %v1064 = vpop.f32.mrb[0].mxu0
        %v1065 = vadd.f32 %v904, %v1064
        %1066 = vmatprep.mubr.f32.mxu0 %v514
        %1067 = vmatmul.mubr.f32.gmra.mrb[0].mxu0 %v513
        %v1068 = vpop.f32.mrb[0].mxu0
        %v1069 = vadd.f32 %v908, %v1068
        %v1070 = vpop.f32.mrb[0].mxu0
        %v1071 = vadd.f32 %v910, %v1070
        %1072 = vmatprep.mubr.f32.mxu0 %v518
        %1073 = vmatmul.mubr.f32.gmra.mrb[0].mxu0 %v517
        %v1074 = vpop.f32.mrb[0].mxu0
        %v1075 = vadd.f32 %v914, %v1074
        %v1076 = vpop.f32.mrb[0].mxu0
        %v1077 = vadd.f32 %v916, %v1076
        %1078 = vmatprep.mubr.f32.mxu0 %v522
        %1079 = vmatmul.mubr.f32.gmra.mrb[0].mxu0 %v521
        %v1080 = vpop.f32.mrb[0].mxu0
        %v1081 = vadd.f32 %v920, %v1080
        %v1082 = vpop.f32.mrb[0].mxu0
        %v1083 = vadd.f32 %v922, %v1082
        %1084 = vmatprep.mubr.f32.mxu0 %v526
        %1085 = vmatmul.mubr.f32.gmra.mrb[0].mxu0 %v525
        %v1086 = vpop.f32.mrb[0].mxu0
        %v1087 = vadd.f32 %v926, %v1086
        %v1088 = vpop.f32.mrb[0].mxu0
        %v1089 = vadd.f32 %v928, %v1088
        %1090 = vmatprep.mubr.f32.mxu0 %v530
        %1091 = vmatmul.mubr.f32.gmra.mrb[0].mxu0 %v529
        %v1092 = vpop.f32.mrb[0].mxu0
        %v1093 = vadd.f32 %v932, %v1092
        %v1094 = vpop.f32.mrb[0].mxu0
        %v1095 = vadd.f32 %v934, %v1094
        %1096 = vmatprep.mubr.f32.mxu0 %v534
        %1097 = vmatmul.mubr.f32.gmra.mrb[0].mxu0 %v533
        %v1098 = vpop.f32.mrb[0].mxu0
        %v1099 = vadd.f32 %v938, %v1098
        %v1100 = vpop.f32.mrb[0].mxu0
        %v1101 = vadd.f32 %v940, %v1100
        %1102 = vmatprep.mubr.f32.mxu0 %v538
        %1103 = vmatmul.mubr.f32.gmra.mrb[0].mxu0 %v537
        %v1104 = vpop.f32.mrb[0].mxu0
        %v1105 = vadd.f32 %v944, %v1104
        %v1106 = vpop.f32.mrb[0].mxu0
        %v1107 = vadd.f32 %v946, %v1106
        %1108 = vmatprep.mubr.f32.mxu0 %v542
        %1109 = vmatmul.mubr.f32.gmra.mrb[0].mxu0 %v541
        %v1110 = vpop.f32.mrb[0].mxu0
        %v1111 = vadd.f32 %v950, %v1110
        %v1112 = vpop.f32.mrb[0].mxu0
        %v1113 = vadd.f32 %v952, %v1112
        %1114 = vmatprep.mubr.f32.mxu0 %v546
        %1115 = vmatmul.mubr.f32.gmra.mrb[0].mxu0 %v545
        %v1116 = vpop.f32.mrb[0].mxu0
        %v1117 = vadd.f32 %v956, %v1116
        %v1118 = vpop.f32.mrb[0].mxu0
        %v1119 = vadd.f32 %v958, %v1118
        %1120 = vmatprep.mubr.f32.mxu0 %v550
        %1121 = vmatmul.mubr.f32.gmra.mrb[0].mxu0 %v549
        %v1122 = vpop.f32.mrb[0].mxu0
        %v1123 = vadd.f32 %v962, %v1122
        %v1124 = vpop.f32.mrb[0].mxu0
        %v1125 = vadd.f32 %v964, %v1124
        %1126 = vmatprep.mubr.f32.mxu0 %v554
        %1127 = vmatmul.mubr.f32.gmra.mrb[0].mxu0 %v553
        %v1128 = vpop.f32.mrb[0].mxu0
        %v1129 = vadd.f32 %v968, %v1128
        %v1130 = vpop.f32.mrb[0].mxu0
        %v1131 = vadd.f32 %v970, %v1130
        %1132 = vdwg.mxu0
        %1133 = vmatprep.subr.mxu0 %v558
        %1134 = vmatpush1.msra.mxu0 %v557
        %1135 = vmatprep.subr.mxu0 %v562
        %1136 = vmatpush1.msra.mxu0 %v561
        %1137 = vmatprep.subr.mxu0 %v566
        %1138 = vmatpush1.msra.mxu0 %v565
        %1139 = vmatprep.subr.mxu0 %v570
        %1140 = vmatpush1.msra.mxu0 %v569
        %1141 = vmatprep.subr.mxu0 %v574
        %1142 = vmatpush1.msra.mxu0 %v573
        %1143 = vmatprep.subr.mxu0 %v578
        %1144 = vmatpush1.msra.mxu0 %v577
        %1145 = vmatprep.subr.mxu0 %v582
        %1146 = vmatpush1.msra.mxu0 %v581
        %1147 = vmatprep.subr.mxu0 %v586
        %1148 = vmatpush1.msra.mxu0 %v585
        %1149 = vmatprep.subr.mxu0 %v590
        %1150 = vmatpush1.msra.mxu0 %v589
        %1151 = vmatprep.subr.mxu0 %v594
        %1152 = vmatpush1.msra.mxu0 %v593
        %1153 = vmatprep.subr.mxu0 %v598
        %1154 = vmatpush1.msra.mxu0 %v597
        %1155 = vmatprep.subr.mxu0 %v602
        %1156 = vmatpush1.msra.mxu0 %v601
        %1157 = vmatprep.subr.mxu0 %v606
        %1158 = vmatpush1.msra.mxu0 %v605
        %1159 = vmatprep.subr.mxu0 %v610
        %1160 = vmatpush1.msra.mxu0 %v609
        %1161 = vmatprep.subr.mxu0 %v614
        %1162 = vmatpush1.msra.mxu0 %v613
        %1163 = vmatprep.subr.mxu0 %v618
        %1164 = vmatpush1.msra.mxu0 %v617
        %1165 = vmatprep.subr.mxu0 %v622
        %1166 = vmatpush1.msra.mxu0 %v621
        %1167 = vmatprep.subr.mxu0 %v626
        %1168 = vmatpush1.msra.mxu0 %v625
        %1169 = vmatprep.subr.mxu0 %v630
        %1170 = vmatpush1.msra.mxu0 %v629
        %1171 = vmatprep.subr.mxu0 %v634
        %1172 = vmatpush1.msra.mxu0 %v633
        %1173 = vmatprep.subr.mxu0 %v638
        %1174 = vmatpush1.msra.mxu0 %v637
        %1175 = vmatprep.subr.mxu0 %v642
        %1176 = vmatpush1.msra.mxu0 %v641
        %1177 = vmatprep.subr.mxu0 %v646
        %1178 = vmatpush1.msra.mxu0 %v645
        %1179 = vmatprep.subr.mxu0 %v650
        %1180 = vmatpush1.msra.mxu0 %v649
        %1181 = vmatprep.subr.mxu0 %v654
        %1182 = vmatpush1.msra.mxu0 %v653
        %1183 = vmatprep.subr.mxu0 %v658
        %1184 = vmatpush1.msra.mxu0 %v657
        %1185 = vmatprep.subr.mxu0 %v662
        %1186 = vmatpush1.msra.mxu0 %v661
        %1187 = vmatprep.subr.mxu0 %v666
        %1188 = vmatpush1.msra.mxu0 %v665
        %1189 = vmatprep.subr.mxu0 %v670
        %1190 = vmatpush1.msra.mxu0 %v669
        %1191 = vmatprep.subr.mxu0 %v674
        %1192 = vmatpush1.msra.mxu0 %v673
        %1193 = vmatprep.subr.mxu0 %v678
        %1194 = vmatpush1.msra.mxu0 %v677
        %1195 = vmatprep.subr.mxu0 %v682
        %1196 = vmatpush1.msra.mxu0 %v681
        %1197 = vmatprep.mubr.f32.mxu0 %v492
        %1198 = vmatmul.mubr.f32.gmra.mrb[0].mxu0 %v491
        %v1199 = vpop.f32.mrb[0].mxu0
        %v1200 = vadd.f32 0.0, %v1199
        %v1201 = vpop.f32.mrb[0].mxu0
        %v1202 = vadd.f32 0.0, %v1201
        %1203 = vmatprep.mubr.f32.mxu0 %v496
        %1204 = vmatmul.mubr.f32.gmra.mrb[0].mxu0 %v495
        %v1205 = vpop.f32.mrb[0].mxu0
        %v1206 = vadd.f32 0.0, %v1205
        %v1207 = vpop.f32.mrb[0].mxu0
        %v1208 = vadd.f32 0.0, %v1207
        %1209 = vmatprep.mubr.f32.mxu0 %v500
        %1210 = vmatmul.mubr.f32.gmra.mrb[0].mxu0 %v499
        %v1211 = vpop.f32.mrb[0].mxu0
        %v1212 = vadd.f32 0.0, %v1211
        %v1213 = vpop.f32.mrb[0].mxu0
        %v1214 = vadd.f32 0.0, %v1213
        %1215 = vmatprep.mubr.f32.mxu0 %v504
        %1216 = vmatmul.mubr.f32.gmra.mrb[0].mxu0 %v503
        %v1217 = vpop.f32.mrb[0].mxu0
        %v1218 = vadd.f32 0.0, %v1217
        %v1219 = vpop.f32.mrb[0].mxu0
        %v1220 = vadd.f32 0.0, %v1219
        %1221 = vmatprep.mubr.f32.mxu0 %v508
        %1222 = vmatmul.mubr.f32.gmra.mrb[0].mxu0 %v507
        %v1223 = vpop.f32.mrb[0].mxu0
        %v1224 = vadd.f32 0.0, %v1223
        %v1225 = vpop.f32.mrb[0].mxu0
        %v1226 = vadd.f32 0.0, %v1225
        %1227 = vmatprep.mubr.f32.mxu0 %v512
        %1228 = vmatmul.mubr.f32.gmra.mrb[0].mxu0 %v511
        %v1229 = vpop.f32.mrb[0].mxu0
        %v1230 = vadd.f32 0.0, %v1229
        %v1231 = vpop.f32.mrb[0].mxu0
        %v1232 = vadd.f32 0.0, %v1231
        %1233 = vmatprep.mubr.f32.mxu0 %v516
        %1234 = vmatmul.mubr.f32.gmra.mrb[0].mxu0 %v515
        %v1235 = vpop.f32.mrb[0].mxu0
        %v1236 = vadd.f32 0.0, %v1235
        %v1237 = vpop.f32.mrb[0].mxu0
        %v1238 = vadd.f32 0.0, %v1237
        %1239 = vmatprep.mubr.f32.mxu0 %v520
        %1240 = vmatmul.mubr.f32.gmra.mrb[0].mxu0 %v519
        %v1241 = vpop.f32.mrb[0].mxu0
        %v1242 = vadd.f32 0.0, %v1241
        %v1243 = vpop.f32.mrb[0].mxu0
        %v1244 = vadd.f32 0.0, %v1243
        %1245 = vmatprep.mubr.f32.mxu0 %v524
        %1246 = vmatmul.mubr.f32.gmra.mrb[0].mxu0 %v523
        %v1247 = vpop.f32.mrb[0].mxu0
        %v1248 = vadd.f32 0.0, %v1247
        %v1249 = vpop.f32.mrb[0].mxu0
        %v1250 = vadd.f32 0.0, %v1249
        %1251 = vmatprep.mubr.f32.mxu0 %v528
        %1252 = vmatmul.mubr.f32.gmra.mrb[0].mxu0 %v527
        %v1253 = vpop.f32.mrb[0].mxu0
        %v1254 = vadd.f32 0.0, %v1253
        %v1255 = vpop.f32.mrb[0].mxu0
        %v1256 = vadd.f32 0.0, %v1255
        %1257 = vmatprep.mubr.f32.mxu0 %v532
        %1258 = vmatmul.mubr.f32.gmra.mrb[0].mxu0 %v531
        %v1259 = vpop.f32.mrb[0].mxu0
        %v1260 = vadd.f32 0.0, %v1259
        %v1261 = vpop.f32.mrb[0].mxu0
        %v1262 = vadd.f32 0.0, %v1261
        %1263 = vmatprep.mubr.f32.mxu0 %v536
        %1264 = vmatmul.mubr.f32.gmra.mrb[0].mxu0 %v535
        %v1265 = vpop.f32.mrb[0].mxu0
        %v1266 = vadd.f32 0.0, %v1265
        %v1267 = vpop.f32.mrb[0].mxu0
        %v1268 = vadd.f32 0.0, %v1267
        %1269 = vmatprep.mubr.f32.mxu0 %v540
        %1270 = vmatmul.mubr.f32.gmra.mrb[0].mxu0 %v539
        %v1271 = vpop.f32.mrb[0].mxu0
        %v1272 = vadd.f32 0.0, %v1271
        %v1273 = vpop.f32.mrb[0].mxu0
        %v1274 = vadd.f32 0.0, %v1273
        %1275 = vmatprep.mubr.f32.mxu0 %v544
        %1276 = vmatmul.mubr.f32.gmra.mrb[0].mxu0 %v543
        %v1277 = vpop.f32.mrb[0].mxu0
        %v1278 = vadd.f32 0.0, %v1277
        %v1279 = vpop.f32.mrb[0].mxu0
        %v1280 = vadd.f32 0.0, %v1279
        %1281 = vmatprep.mubr.f32.mxu0 %v548
        %1282 = vmatmul.mubr.f32.gmra.mrb[0].mxu0 %v547
        %v1283 = vpop.f32.mrb[0].mxu0
        %v1284 = vadd.f32 0.0, %v1283
        %v1285 = vpop.f32.mrb[0].mxu0
        %v1286 = vadd.f32 0.0, %v1285
        %1287 = vmatprep.mubr.f32.mxu0 %v552
        %1288 = vmatmul.mubr.f32.gmra.mrb[0].mxu0 %v551
        %v1289 = vpop.f32.mrb[0].mxu0
        %v1290 = vadd.f32 0.0, %v1289
        %v1291 = vpop.f32.mrb[0].mxu0
        %v1292 = vadd.f32 0.0, %v1291
        %1293 = vdwg.mxu0
        %1294 = vmatprep.subr.mxu0 %v686
        %1295 = vmatpush1.msra.mxu0 %v685
        %1296 = vmatprep.subr.mxu0 %v690
        %1297 = vmatpush1.msra.mxu0 %v689
        %1298 = vmatprep.subr.mxu0 %v694
        %1299 = vmatpush1.msra.mxu0 %v693
        %1300 = vmatprep.subr.mxu0 %v698
        %1301 = vmatpush1.msra.mxu0 %v697
        %1302 = vmatprep.subr.mxu0 %v702
        %1303 = vmatpush1.msra.mxu0 %v701
        %1304 = vmatprep.subr.mxu0 %v706
        %1305 = vmatpush1.msra.mxu0 %v705
        %1306 = vmatprep.subr.mxu0 %v710
        %1307 = vmatpush1.msra.mxu0 %v709
        %1308 = vmatprep.subr.mxu0 %v714
        %1309 = vmatpush1.msra.mxu0 %v713
        %1310 = vmatprep.subr.mxu0 %v718
        %1311 = vmatpush1.msra.mxu0 %v717
        %1312 = vmatprep.subr.mxu0 %v722
        %1313 = vmatpush1.msra.mxu0 %v721
        %1314 = vmatprep.subr.mxu0 %v726
        %1315 = vmatpush1.msra.mxu0 %v725
        %1316 = vmatprep.subr.mxu0 %v730
        %1317 = vmatpush1.msra.mxu0 %v729
        %1318 = vmatprep.subr.mxu0 %v734
        %1319 = vmatpush1.msra.mxu0 %v733
        %1320 = vmatprep.subr.mxu0 %v738
        %1321 = vmatpush1.msra.mxu0 %v737
        %1322 = vmatprep.subr.mxu0 %v742
        %1323 = vmatpush1.msra.mxu0 %v741
        %1324 = vmatprep.subr.mxu0 %v746
        %1325 = vmatpush1.msra.mxu0 %v745
        %1326 = vmatprep.subr.mxu0 %v750
        %1327 = vmatpush1.msra.mxu0 %v749
        %1328 = vmatprep.subr.mxu0 %v754
        %1329 = vmatpush1.msra.mxu0 %v753
        %1330 = vmatprep.subr.mxu0 %v758
        %1331 = vmatpush1.msra.mxu0 %v757
        %1332 = vmatprep.subr.mxu0 %v762
        %1333 = vmatpush1.msra.mxu0 %v761
        %1334 = vmatprep.subr.mxu0 %v766
        %1335 = vmatpush1.msra.mxu0 %v765
        %1336 = vmatprep.subr.mxu0 %v770
        %1337 = vmatpush1.msra.mxu0 %v769
        %1338 = vmatprep.subr.mxu0 %v774
        %1339 = vmatpush1.msra.mxu0 %v773
        %1340 = vmatprep.subr.mxu0 %v778
        %1341 = vmatpush1.msra.mxu0 %v777
        %1342 = vmatprep.subr.mxu0 %v782
        %1343 = vmatpush1.msra.mxu0 %v781
        %1344 = vmatprep.subr.mxu0 %v786
        %1345 = vmatpush1.msra.mxu0 %v785
        %1346 = vmatprep.subr.mxu0 %v790
        %1347 = vmatpush1.msra.mxu0 %v789
        %1348 = vmatprep.subr.mxu0 %v794
        %1349 = vmatpush1.msra.mxu0 %v793
        %1350 = vmatprep.subr.mxu0 %v798
        %1351 = vmatpush1.msra.mxu0 %v797
        %1352 = vmatprep.subr.mxu0 %v802
        %1353 = vmatpush1.msra.mxu0 %v801
        %1354 = vmatprep.subr.mxu0 %v806
        %1355 = vmatpush1.msra.mxu0 %v805
        %1356 = vmatprep.subr.mxu0 %v810
        %1357 = vmatpush1.msra.mxu0 %v809
        %1358 = vmatprep.mubr.f32.mxu0 %v494
        %1359 = vmatmul.mubr.f32.gmra.mrb[0].mxu0 %v493
        %v1360 = vpop.f32.mrb[0].mxu0
        %v1361 = vadd.f32 %v1200, %v1360
        %v1362 = vpop.f32.mrb[0].mxu0
        %v1363 = vadd.f32 %v1202, %v1362
        %1364 = vmatprep.mubr.f32.mxu0 %v498
        %1365 = vmatmul.mubr.f32.gmra.mrb[0].mxu0 %v497
        %v1366 = vpop.f32.mrb[0].mxu0
        %v1367 = vadd.f32 %v1206, %v1366
        %v1368 = vpop.f32.mrb[0].mxu0
        %v1369 = vadd.f32 %v1208, %v1368
        %1370 = vmatprep.mubr.f32.mxu0 %v502
        %1371 = vmatmul.mubr.f32.gmra.mrb[0].mxu0 %v501
        %v1372 = vpop.f32.mrb[0].mxu0
        %v1373 = vadd.f32 %v1212, %v1372
        %v1374 = vpop.f32.mrb[0].mxu0
        %v1375 = vadd.f32 %v1214, %v1374
        %1376 = vmatprep.mubr.f32.mxu0 %v506
        %1377 = vmatmul.mubr.f32.gmra.mrb[0].mxu0 %v505
        %v1378 = vpop.f32.mrb[0].mxu0
        %v1379 = vadd.f32 %v1218, %v1378
        %v1380 = vpop.f32.mrb[0].mxu0
        %v1381 = vadd.f32 %v1220, %v1380
        %1382 = vmatprep.mubr.f32.mxu0 %v510
        %1383 = vmatmul.mubr.f32.gmra.mrb[0].mxu0 %v509
        %v1384 = vpop.f32.mrb[0].mxu0
        %v1385 = vadd.f32 %v1224, %v1384
        %v1386 = vpop.f32.mrb[0].mxu0
        %v1387 = vadd.f32 %v1226, %v1386
        %1388 = vmatprep.mubr.f32.mxu0 %v514
        %1389 = vmatmul.mubr.f32.gmra.mrb[0].mxu0 %v513
        %v1390 = vpop.f32.mrb[0].mxu0
        %v1391 = vadd.f32 %v1230, %v1390
        %v1392 = vpop.f32.mrb[0].mxu0
        %v1393 = vadd.f32 %v1232, %v1392
        %1394 = vmatprep.mubr.f32.mxu0 %v518
        %1395 = vmatmul.mubr.f32.gmra.mrb[0].mxu0 %v517
        %v1396 = vpop.f32.mrb[0].mxu0
        %v1397 = vadd.f32 %v1236, %v1396
        %v1398 = vpop.f32.mrb[0].mxu0
        %v1399 = vadd.f32 %v1238, %v1398
        %1400 = vmatprep.mubr.f32.mxu0 %v522
        %1401 = vmatmul.mubr.f32.gmra.mrb[0].mxu0 %v521
        %v1402 = vpop.f32.mrb[0].mxu0
        %v1403 = vadd.f32 %v1242, %v1402
        %v1404 = vpop.f32.mrb[0].mxu0
        %v1405 = vadd.f32 %v1244, %v1404
        %1406 = vmatprep.mubr.f32.mxu0 %v526
        %1407 = vmatmul.mubr.f32.gmra.mrb[0].mxu0 %v525
        %v1408 = vpop.f32.mrb[0].mxu0
        %v1409 = vadd.f32 %v1248, %v1408
        %v1410 = vpop.f32.mrb[0].mxu0
        %v1411 = vadd.f32 %v1250, %v1410
        %1412 = vmatprep.mubr.f32.mxu0 %v530
        %1413 = vmatmul.mubr.f32.gmra.mrb[0].mxu0 %v529
        %v1414 = vpop.f32.mrb[0].mxu0
        %v1415 = vadd.f32 %v1254, %v1414
        %v1416 = vpop.f32.mrb[0].mxu0
        %v1417 = vadd.f32 %v1256, %v1416
        %1418 = vmatprep.mubr.f32.mxu0 %v534
        %1419 = vmatmul.mubr.f32.gmra.mrb[0].mxu0 %v533
        %v1420 = vpop.f32.mrb[0].mxu0
        %v1421 = vadd.f32 %v1260, %v1420
        %v1422 = vpop.f32.mrb[0].mxu0
        %v1423 = vadd.f32 %v1262, %v1422
        %1424 = vmatprep.mubr.f32.mxu0 %v538
        %1425 = vmatmul.mubr.f32.gmra.mrb[0].mxu0 %v537
        %v1426 = vpop.f32.mrb[0].mxu0
        %v1427 = vadd.f32 %v1266, %v1426
        %v1428 = vpop.f32.mrb[0].mxu0
        %v1429 = vadd.f32 %v1268, %v1428
        %1430 = vmatprep.mubr.f32.mxu0 %v542
        %1431 = vmatmul.mubr.f32.gmra.mrb[0].mxu0 %v541
        %v1432 = vpop.f32.mrb[0].mxu0
        %v1433 = vadd.f32 %v1272, %v1432
        %v1434 = vpop.f32.mrb[0].mxu0
        %v1435 = vadd.f32 %v1274, %v1434
        %1436 = vmatprep.mubr.f32.mxu0 %v546
        %1437 = vmatmul.mubr.f32.gmra.mrb[0].mxu0 %v545
        %v1438 = vpop.f32.mrb[0].mxu0
        %v1439 = vadd.f32 %v1278, %v1438
        %v1440 = vpop.f32.mrb[0].mxu0
        %v1441 = vadd.f32 %v1280, %v1440
        %1442 = vmatprep.mubr.f32.mxu0 %v550
        %1443 = vmatmul.mubr.f32.gmra.mrb[0].mxu0 %v549
        %v1444 = vpop.f32.mrb[0].mxu0
        %v1445 = vadd.f32 %v1284, %v1444
        %v1446 = vpop.f32.mrb[0].mxu0
        %v1447 = vadd.f32 %v1286, %v1446
        %1448 = vmatprep.mubr.f32.mxu0 %v554
        %1449 = vmatmul.mubr.f32.gmra.mrb[0].mxu0 %v553
        %v1450 = vpop.f32.mrb[0].mxu0
        %v1451 = vadd.f32 %v1290, %v1450
        %v1452 = vpop.f32.mrb[0].mxu0
        %v1453 = vadd.f32 %v1292, %v1452
        %1454 = vdwg.mxu0
        %v1455 = vadd.f32 %v1039, %v1045
        %v1456 = vadd.f32 %v1455, %v1051
        %v1457 = vadd.f32 %v1456, %v1057
        %v1458 = vadd.f32 %v1457, %v1063
        %v1459 = vadd.f32 %v1458, %v1069
        %v1460 = vadd.f32 %v1459, %v1075
        %v1461 = vadd.f32 %v1460, %v1081
        %v1462 = vadd.f32 %v1461, %v1087
        %v1463 = vadd.f32 %v1462, %v1093
        %v1464 = vadd.f32 %v1463, %v1099
        %v1465 = vadd.f32 %v1464, %v1105
        %v1466 = vadd.f32 %v1465, %v1111
        %v1467 = vadd.f32 %v1466, %v1117
        %v1468 = vadd.f32 %v1467, %v1123
        %v1469 = vadd.f32 %v1468, %v1129
        %v1470 = vrot.slane %v1469, 4
        %v1471 = vadd.f32 %v1469, %v1470
        %v1472 = vrot.slane %v1471, 2
        %v1473 = vadd.f32 %v1471, %v1472
        %v1474 = vrot.slane %v1473, 1
        %v1475 = vadd.f32 %v1473, %v1474
        %v1476 = vadd.f32 %v1041, %v1047
        %v1477 = vadd.f32 %v1476, %v1053
        %v1478 = vadd.f32 %v1477, %v1059
        %v1479 = vadd.f32 %v1478, %v1065
        %v1480 = vadd.f32 %v1479, %v1071
        %v1481 = vadd.f32 %v1480, %v1077
        %v1482 = vadd.f32 %v1481, %v1083
        %v1483 = vadd.f32 %v1482, %v1089
        %v1484 = vadd.f32 %v1483, %v1095
        %v1485 = vadd.f32 %v1484, %v1101
        %v1486 = vadd.f32 %v1485, %v1107
        %v1487 = vadd.f32 %v1486, %v1113
        %v1488 = vadd.f32 %v1487, %v1119
        %v1489 = vadd.f32 %v1488, %v1125
        %v1490 = vadd.f32 %v1489, %v1131
        %v1491 = vrot.slane %v1490, 4
        %v1492 = vadd.f32 %v1490, %v1491
        %v1493 = vrot.slane %v1492, 2
        %v1494 = vadd.f32 %v1492, %v1493
        %v1495 = vrot.slane %v1494, 1
        %v1496 = vadd.f32 %v1494, %v1495
        %v1497 = vadd.f32 %v1361, %v1367
        %v1498 = vadd.f32 %v1497, %v1373
        %v1499 = vadd.f32 %v1498, %v1379
        %v1500 = vadd.f32 %v1499, %v1385
        %v1501 = vadd.f32 %v1500, %v1391
        %v1502 = vadd.f32 %v1501, %v1397
        %v1503 = vadd.f32 %v1502, %v1403
        %v1504 = vadd.f32 %v1503, %v1409
        %v1505 = vadd.f32 %v1504, %v1415
        %v1506 = vadd.f32 %v1505, %v1421
        %v1507 = vadd.f32 %v1506, %v1427
        %v1508 = vadd.f32 %v1507, %v1433
        %v1509 = vadd.f32 %v1508, %v1439
        %v1510 = vadd.f32 %v1509, %v1445
        %v1511 = vadd.f32 %v1510, %v1451
        %v1512 = vrot.slane %v1511, 4
        %v1513 = vadd.f32 %v1511, %v1512
        %v1514 = vrot.slane %v1513, 2
        %v1515 = vadd.f32 %v1513, %v1514
        %v1516 = vrot.slane %v1515, 1
        %v1517 = vadd.f32 %v1515, %v1516
        %v1518 = vadd.f32 %v1363, %v1369
        %v1519 = vadd.f32 %v1518, %v1375
        %v1520 = vadd.f32 %v1519, %v1381
        %v1521 = vadd.f32 %v1520, %v1387
        %v1522 = vadd.f32 %v1521, %v1393
        %v1523 = vadd.f32 %v1522, %v1399
        %v1524 = vadd.f32 %v1523, %v1405
        %v1525 = vadd.f32 %v1524, %v1411
        %v1526 = vadd.f32 %v1525, %v1417
        %v1527 = vadd.f32 %v1526, %v1423
        %v1528 = vadd.f32 %v1527, %v1429
        %v1529 = vadd.f32 %v1528, %v1435
        %v1530 = vadd.f32 %v1529, %v1441
        %v1531 = vadd.f32 %v1530, %v1447
        %v1532 = vadd.f32 %v1531, %v1453
        %v1533 = vrot.slane %v1532, 4
        %v1534 = vadd.f32 %v1532, %v1533
        %v1535 = vrot.slane %v1534, 2
        %v1536 = vadd.f32 %v1534, %v1535
        %v1537 = vrot.slane %v1536, 1
        %v1538 = vadd.f32 %v1536, %v1537
        %v1539 = vrcp.pop 128.0
        %v1540 = vmul.f32 %v1475, %v1539
        %v1541 = vmul.f32 %v1496, %v1539
        %v1542 = vmul.f32 %v1517, %v1539
        %v1543 = vmul.f32 %v1538, %v1539
        %v1544 = vmul.f32 %v1039, %v1039
        %v1545 = vmul.f32 %v1041, %v1041
        %v1546 = vmul.f32 %v1361, %v1361
        %v1547 = vmul.f32 %v1363, %v1363
        %v1548 = vmul.f32 %v1045, %v1045
        %v1549 = vmul.f32 %v1047, %v1047
        %v1550 = vmul.f32 %v1367, %v1367
        %v1551 = vmul.f32 %v1369, %v1369
        %v1552 = vmul.f32 %v1051, %v1051
        %v1553 = vmul.f32 %v1053, %v1053
        %v1554 = vmul.f32 %v1373, %v1373
        %v1555 = vmul.f32 %v1375, %v1375
        %v1556 = vmul.f32 %v1057, %v1057
        %v1557 = vmul.f32 %v1059, %v1059
        %v1558 = vmul.f32 %v1379, %v1379
        %v1559 = vmul.f32 %v1381, %v1381
        %v1560 = vmul.f32 %v1063, %v1063
        %v1561 = vmul.f32 %v1065, %v1065
        %v1562 = vmul.f32 %v1385, %v1385
        %v1563 = vmul.f32 %v1387, %v1387
        %v1564 = vmul.f32 %v1069, %v1069
        %v1565 = vmul.f32 %v1071, %v1071
        %v1566 = vmul.f32 %v1391, %v1391
        %v1567 = vmul.f32 %v1393, %v1393
        %v1568 = vmul.f32 %v1075, %v1075
        %v1569 = vmul.f32 %v1077, %v1077
        %v1570 = vmul.f32 %v1397, %v1397
        %v1571 = vmul.f32 %v1399, %v1399
        %v1572 = vmul.f32 %v1081, %v1081
        %v1573 = vmul.f32 %v1083, %v1083
        %v1574 = vmul.f32 %v1403, %v1403
        %v1575 = vmul.f32 %v1405, %v1405
        %v1576 = vmul.f32 %v1087, %v1087
        %v1577 = vmul.f32 %v1089, %v1089
        %v1578 = vmul.f32 %v1409, %v1409
        %v1579 = vmul.f32 %v1411, %v1411
        %v1580 = vmul.f32 %v1093, %v1093
        %v1581 = vmul.f32 %v1095, %v1095
        %v1582 = vmul.f32 %v1415, %v1415
        %v1583 = vmul.f32 %v1417, %v1417
        %v1584 = vmul.f32 %v1099, %v1099
        %v1585 = vmul.f32 %v1101, %v1101
        %v1586 = vmul.f32 %v1421, %v1421
        %v1587 = vmul.f32 %v1423, %v1423
        %v1588 = vmul.f32 %v1105, %v1105
        %v1589 = vmul.f32 %v1107, %v1107
        %v1590 = vmul.f32 %v1427, %v1427
        %v1591 = vmul.f32 %v1429, %v1429
        %v1592 = vmul.f32 %v1111, %v1111
        %v1593 = vmul.f32 %v1113, %v1113
        %v1594 = vmul.f32 %v1433, %v1433
        %v1595 = vmul.f32 %v1435, %v1435
        %v1596 = vmul.f32 %v1117, %v1117
        %v1597 = vmul.f32 %v1119, %v1119
        %v1598 = vmul.f32 %v1439, %v1439
        %v1599 = vmul.f32 %v1441, %v1441
        %v1600 = vmul.f32 %v1123, %v1123
        %v1601 = vmul.f32 %v1125, %v1125
        %v1602 = vmul.f32 %v1445, %v1445
        %v1603 = vmul.f32 %v1447, %v1447
        %v1604 = vmul.f32 %v1129, %v1129
        %v1605 = vmul.f32 %v1131, %v1131
        %v1606 = vmul.f32 %v1451, %v1451
        %v1607 = vmul.f32 %v1453, %v1453
        %v1608 = vadd.f32 %v1544, %v1548
        %v1609 = vadd.f32 %v1608, %v1552
        %v1610 = vadd.f32 %v1609, %v1556
        %v1611 = vadd.f32 %v1610, %v1560
        %v1612 = vadd.f32 %v1611, %v1564
        %v1613 = vadd.f32 %v1612, %v1568
        %v1614 = vadd.f32 %v1613, %v1572
        %v1615 = vadd.f32 %v1614, %v1576
        %v1616 = vadd.f32 %v1615, %v1580
        %v1617 = vadd.f32 %v1616, %v1584
        %v1618 = vadd.f32 %v1617, %v1588
        %v1619 = vadd.f32 %v1618, %v1592
        %v1620 = vadd.f32 %v1619, %v1596
        %v1621 = vadd.f32 %v1620, %v1600
        %v1622 = vadd.f32 %v1621, %v1604
        %v1623 = vrot.slane %v1622, 4
        %v1624 = vadd.f32 %v1622, %v1623
        %v1625 = vrot.slane %v1624, 2
        %v1626 = vadd.f32 %v1624, %v1625
        %v1627 = vrot.slane %v1626, 1
        %v1628 = vadd.f32 %v1626, %v1627
        %v1629 = vadd.f32 %v1545, %v1549
        %v1630 = vadd.f32 %v1629, %v1553
        %v1631 = vadd.f32 %v1630, %v1557
        %v1632 = vadd.f32 %v1631, %v1561
        %v1633 = vadd.f32 %v1632, %v1565
        %v1634 = vadd.f32 %v1633, %v1569
        %v1635 = vadd.f32 %v1634, %v1573
        %v1636 = vadd.f32 %v1635, %v1577
        %v1637 = vadd.f32 %v1636, %v1581
        %v1638 = vadd.f32 %v1637, %v1585
        %v1639 = vadd.f32 %v1638, %v1589
        %v1640 = vadd.f32 %v1639, %v1593
        %v1641 = vadd.f32 %v1640, %v1597
        %v1642 = vadd.f32 %v1641, %v1601
        %v1643 = vadd.f32 %v1642, %v1605
        %v1644 = vrot.slane %v1643, 4
        %v1645 = vadd.f32 %v1643, %v1644
        %v1646 = vrot.slane %v1645, 2
        %v1647 = vadd.f32 %v1645, %v1646
        %v1648 = vrot.slane %v1647, 1
        %v1649 = vadd.f32 %v1647, %v1648
        %v1650 = vadd.f32 %v1546, %v1550
        %v1651 = vadd.f32 %v1650, %v1554
        %v1652 = vadd.f32 %v1651, %v1558
        %v1653 = vadd.f32 %v1652, %v1562
        %v1654 = vadd.f32 %v1653, %v1566
        %v1655 = vadd.f32 %v1654, %v1570
        %v1656 = vadd.f32 %v1655, %v1574
        %v1657 = vadd.f32 %v1656, %v1578
        %v1658 = vadd.f32 %v1657, %v1582
        %v1659 = vadd.f32 %v1658, %v1586
        %v1660 = vadd.f32 %v1659, %v1590
        %v1661 = vadd.f32 %v1660, %v1594
        %v1662 = vadd.f32 %v1661, %v1598
        %v1663 = vadd.f32 %v1662, %v1602
        %v1664 = vadd.f32 %v1663, %v1606
        %v1665 = vrot.slane %v1664, 4
        %v1666 = vadd.f32 %v1664, %v1665
        %v1667 = vrot.slane %v1666, 2
        %v1668 = vadd.f32 %v1666, %v1667
        %v1669 = vrot.slane %v1668, 1
        %v1670 = vadd.f32 %v1668, %v1669
        %v1671 = vadd.f32 %v1547, %v1551
        %v1672 = vadd.f32 %v1671, %v1555
        %v1673 = vadd.f32 %v1672, %v1559
        %v1674 = vadd.f32 %v1673, %v1563
        %v1675 = vadd.f32 %v1674, %v1567
        %v1676 = vadd.f32 %v1675, %v1571
        %v1677 = vadd.f32 %v1676, %v1575
        %v1678 = vadd.f32 %v1677, %v1579
        %v1679 = vadd.f32 %v1678, %v1583
        %v1680 = vadd.f32 %v1679, %v1587
        %v1681 = vadd.f32 %v1680, %v1591
        %v1682 = vadd.f32 %v1681, %v1595
        %v1683 = vadd.f32 %v1682, %v1599
        %v1684 = vadd.f32 %v1683, %v1603
        %v1685 = vadd.f32 %v1684, %v1607
        %v1686 = vrot.slane %v1685, 4
        %v1687 = vadd.f32 %v1685, %v1686
        %v1688 = vrot.slane %v1687, 2
        %v1689 = vadd.f32 %v1687, %v1688
        %v1690 = vrot.slane %v1689, 1
        %v1691 = vadd.f32 %v1689, %v1690
        %v1692 = vmul.f32 %v1628, %v1539
        %v1693 = vmul.f32 %v1649, %v1539
        %v1694 = vmul.f32 %v1670, %v1539
        %v1695 = vmul.f32 %v1691, %v1539
        %v1696 = vmul.f32 %v1540, %v1540
        %v1697 = vmul.f32 %v1541, %v1541
        %v1698 = vmul.f32 %v1542, %v1542
        %v1699 = vmul.f32 %v1543, %v1543
        %v1700 = vsub.f32 %v1692, %v1696
        %v1701 = vsub.f32 %v1693, %v1697
        %v1702 = vsub.f32 %v1694, %v1698
        %v1703 = vsub.f32 %v1695, %v1699
        %v1704 = vmax.f32 %v1700, 0.0
        %v1705 = vmax.f32 %v1701, 0.0
        %v1706 = vmax.f32 %v1702, 0.0
        %v1707 = vmax.f32 %v1703, 0.0
        %v1708 = vld [vmem:[%s312] sm:$0xf]
        %v1709 = vadd.f32 %v1704, 1e-05
        %v1710 = vadd.f32 %v1705, 1e-05
        %v1711 = vadd.f32 %v1706, 1e-05
        %v1712 = vadd.f32 %v1707, 1e-05
        %v1713 = vrsqrt.pop %v1709
        %v1714 = vrsqrt.pop %v1710
        %v1715 = vrsqrt.pop %v1711
        %v1716 = vrsqrt.pop %v1712
        %v1721 = vcombine.low %v1713, %v1714
        %v1722 = vcombine.low %v1715, %v1716
        %v1724 = vunpack.c.l.s4 1966171168
        %v1725 = vunpack.c.0.s8 %v1724
        %v1726 = vlaneseq
        %v1727 = vshrl.u32 %v1726, 7
        %v1728 = vsub.s32 %v1725, %v1727
        %v1729 = vrot.slane %v1721, %v1728
        %v1731 = vunpack.c.l.s4 1966171168
        %v1732 = vunpack.c.0.s8 %v1731
        %v1733 = vlaneseq
        %v1734 = vshrl.u32 %v1733, 7
        %v1735 = vsub.s32 %v1732, %v1734
        %v1736 = vrot.slane %v1722, %v1735
        %v1737 = vcombine.low %v1729, %v1736
        %v1739 = vunpack.c.l.s4 1966171168
        %v1740 = vunpack.c.0.s8 %v1739
        %v1741 = vlaneseq
        %v1742 = vshrl.u32 %v1741, 7
        %v1743 = vsub.s32 %v1740, %v1742
        %v1744 = vrot.slane %v1737, %v1743
        %v1746 = vmul.f32 %v1708, %v1744
        %v1747 = vld [vmem:[%s321] sm:$0xf]
        %v1749 = vlaneseq
        %v1750 = vshrl.u32 %v1749, 7
        %v1751 = vsub.s32 0, %v1750
        %v1752 = vrot.slane %v1746, %v1751
        %v1753 = vlaneseq
        %v1754 = vshrl.u32 %v1753, 7
        %v1755 = vsub.s32 1, %v1754
        %v1756 = vrot.slane %v1746, %v1755
        %v1757 = vlaneseq
        %v1758 = vshrl.u32 %v1757, 7
        %v1759 = vsub.s32 2, %v1758
        %v1760 = vrot.slane %v1746, %v1759
        %v1761 = vlaneseq
        %v1762 = vshrl.u32 %v1761, 7
        %v1763 = vsub.s32 3, %v1762
        %v1764 = vrot.slane %v1746, %v1763
        %v1769 = vmul.f32 %v1540, %v1752
        %v1770 = vmul.f32 %v1541, %v1756
        %v1771 = vmul.f32 %v1542, %v1760
        %v1772 = vmul.f32 %v1543, %v1764
        %v1777 = vcombine.low %v1769, %v1770
        %v1778 = vcombine.low %v1771, %v1772
        %v1780 = vunpack.c.l.s4 1966171168
        %v1781 = vunpack.c.0.s8 %v1780
        %v1782 = vlaneseq
        %v1783 = vshrl.u32 %v1782, 7
        %v1784 = vsub.s32 %v1781, %v1783
        %v1785 = vrot.slane %v1777, %v1784
        %v1787 = vunpack.c.l.s4 1966171168
        %v1788 = vunpack.c.0.s8 %v1787
        %v1789 = vlaneseq
        %v1790 = vshrl.u32 %v1789, 7
        %v1791 = vsub.s32 %v1788, %v1790
        %v1792 = vrot.slane %v1778, %v1791
        %v1793 = vcombine.low %v1785, %v1792
        %v1795 = vunpack.c.l.s4 1966171168
        %v1796 = vunpack.c.0.s8 %v1795
        %v1797 = vlaneseq
        %v1798 = vshrl.u32 %v1797, 7
        %v1799 = vsub.s32 %v1796, %v1798
        %v1800 = vrot.slane %v1793, %v1799
        %v1802 = vsub.f32 %v1747, %v1800
        %v1803 = vmul.f32 %v1039, %v1752
        %v1804 = vmul.f32 %v1041, %v1756
        %v1805 = vmul.f32 %v1361, %v1760
        %v1806 = vmul.f32 %v1363, %v1764
        %v1807 = vmul.f32 %v1045, %v1752
        %v1808 = vmul.f32 %v1047, %v1756
        %v1809 = vmul.f32 %v1367, %v1760
        %v1810 = vmul.f32 %v1369, %v1764
        %v1811 = vmul.f32 %v1051, %v1752
        %v1812 = vmul.f32 %v1053, %v1756
        %v1813 = vmul.f32 %v1373, %v1760
        %v1814 = vmul.f32 %v1375, %v1764
        %v1815 = vmul.f32 %v1057, %v1752
        %v1816 = vmul.f32 %v1059, %v1756
        %v1817 = vmul.f32 %v1379, %v1760
        %v1818 = vmul.f32 %v1381, %v1764
        %v1819 = vmul.f32 %v1063, %v1752
        %v1820 = vmul.f32 %v1065, %v1756
        %v1821 = vmul.f32 %v1385, %v1760
        %v1822 = vmul.f32 %v1387, %v1764
        %v1823 = vmul.f32 %v1069, %v1752
        %v1824 = vmul.f32 %v1071, %v1756
        %v1825 = vmul.f32 %v1391, %v1760
        %v1826 = vmul.f32 %v1393, %v1764
        %v1827 = vmul.f32 %v1075, %v1752
        %v1828 = vmul.f32 %v1077, %v1756
        %v1829 = vmul.f32 %v1397, %v1760
        %v1830 = vmul.f32 %v1399, %v1764
        %v1831 = vmul.f32 %v1081, %v1752
        %v1832 = vmul.f32 %v1083, %v1756
        %v1833 = vmul.f32 %v1403, %v1760
        %v1834 = vmul.f32 %v1405, %v1764
        %v1835 = vmul.f32 %v1087, %v1752
        %v1836 = vmul.f32 %v1089, %v1756
        %v1837 = vmul.f32 %v1409, %v1760
        %v1838 = vmul.f32 %v1411, %v1764
        %v1839 = vmul.f32 %v1093, %v1752
        %v1840 = vmul.f32 %v1095, %v1756
        %v1841 = vmul.f32 %v1415, %v1760
        %v1842 = vmul.f32 %v1417, %v1764
        %v1843 = vmul.f32 %v1099, %v1752
        %v1844 = vmul.f32 %v1101, %v1756
        %v1845 = vmul.f32 %v1421, %v1760
        %v1846 = vmul.f32 %v1423, %v1764
        %v1847 = vmul.f32 %v1105, %v1752
        %v1848 = vmul.f32 %v1107, %v1756
        %v1849 = vmul.f32 %v1427, %v1760
        %v1850 = vmul.f32 %v1429, %v1764
        %v1851 = vmul.f32 %v1111, %v1752
        %v1852 = vmul.f32 %v1113, %v1756
        %v1853 = vmul.f32 %v1433, %v1760
        %v1854 = vmul.f32 %v1435, %v1764
        %v1855 = vmul.f32 %v1117, %v1752
        %v1856 = vmul.f32 %v1119, %v1756
        %v1857 = vmul.f32 %v1439, %v1760
        %v1858 = vmul.f32 %v1441, %v1764
        %v1859 = vmul.f32 %v1123, %v1752
        %v1860 = vmul.f32 %v1125, %v1756
        %v1861 = vmul.f32 %v1445, %v1760
        %v1862 = vmul.f32 %v1447, %v1764
        %v1863 = vmul.f32 %v1129, %v1752
        %v1864 = vmul.f32 %v1131, %v1756
        %v1865 = vmul.f32 %v1451, %v1760
        %v1866 = vmul.f32 %v1453, %v1764
        %v1868 = vlaneseq
        %v1869 = vshrl.u32 %v1868, 7
        %v1870 = vsub.s32 0, %v1869
        %v1871 = vrot.slane %v1802, %v1870
        %v1872 = vlaneseq
        %v1873 = vshrl.u32 %v1872, 7
        %v1874 = vsub.s32 1, %v1873
        %v1875 = vrot.slane %v1802, %v1874
        %v1876 = vlaneseq
        %v1877 = vshrl.u32 %v1876, 7
        %v1878 = vsub.s32 2, %v1877
        %v1879 = vrot.slane %v1802, %v1878
        %v1880 = vlaneseq
        %v1881 = vshrl.u32 %v1880, 7
        %v1882 = vsub.s32 3, %v1881
        %v1883 = vrot.slane %v1802, %v1882
        %v1888 = vadd.f32 %v1803, %v1871
        %v1889 = vadd.f32 %v1804, %v1875
        %v1890 = vadd.f32 %v1805, %v1879
        %v1891 = vadd.f32 %v1806, %v1883
        %v1892 = vadd.f32 %v1807, %v1871
        %v1893 = vadd.f32 %v1808, %v1875
        %v1894 = vadd.f32 %v1809, %v1879
        %v1895 = vadd.f32 %v1810, %v1883
        %v1896 = vadd.f32 %v1811, %v1871
        %v1897 = vadd.f32 %v1812, %v1875
        %v1898 = vadd.f32 %v1813, %v1879
        %v1899 = vadd.f32 %v1814, %v1883
        %v1900 = vadd.f32 %v1815, %v1871
        %v1901 = vadd.f32 %v1816, %v1875
        %v1902 = vadd.f32 %v1817, %v1879
        %v1903 = vadd.f32 %v1818, %v1883
        %v1904 = vadd.f32 %v1819, %v1871
        %v1905 = vadd.f32 %v1820, %v1875
        %v1906 = vadd.f32 %v1821, %v1879
        %v1907 = vadd.f32 %v1822, %v1883
        %v1908 = vadd.f32 %v1823, %v1871
        %v1909 = vadd.f32 %v1824, %v1875
        %v1910 = vadd.f32 %v1825, %v1879
        %v1911 = vadd.f32 %v1826, %v1883
        %v1912 = vadd.f32 %v1827, %v1871
        %v1913 = vadd.f32 %v1828, %v1875
        %v1914 = vadd.f32 %v1829, %v1879
        %v1915 = vadd.f32 %v1830, %v1883
        %v1916 = vadd.f32 %v1831, %v1871
        %v1917 = vadd.f32 %v1832, %v1875
        %v1918 = vadd.f32 %v1833, %v1879
        %v1919 = vadd.f32 %v1834, %v1883
        %v1920 = vadd.f32 %v1835, %v1871
        %v1921 = vadd.f32 %v1836, %v1875
        %v1922 = vadd.f32 %v1837, %v1879
        %v1923 = vadd.f32 %v1838, %v1883
        %v1924 = vadd.f32 %v1839, %v1871
        %v1925 = vadd.f32 %v1840, %v1875
        %v1926 = vadd.f32 %v1841, %v1879
        %v1927 = vadd.f32 %v1842, %v1883
        %v1928 = vadd.f32 %v1843, %v1871
        %v1929 = vadd.f32 %v1844, %v1875
        %v1930 = vadd.f32 %v1845, %v1879
        %v1931 = vadd.f32 %v1846, %v1883
        %v1932 = vadd.f32 %v1847, %v1871
        %v1933 = vadd.f32 %v1848, %v1875
        %v1934 = vadd.f32 %v1849, %v1879
        %v1935 = vadd.f32 %v1850, %v1883
        %v1936 = vadd.f32 %v1851, %v1871
        %v1937 = vadd.f32 %v1852, %v1875
        %v1938 = vadd.f32 %v1853, %v1879
        %v1939 = vadd.f32 %v1854, %v1883
        %v1940 = vadd.f32 %v1855, %v1871
        %v1941 = vadd.f32 %v1856, %v1875
        %v1942 = vadd.f32 %v1857, %v1879
        %v1943 = vadd.f32 %v1858, %v1883
        %v1944 = vadd.f32 %v1859, %v1871
        %v1945 = vadd.f32 %v1860, %v1875
        %v1946 = vadd.f32 %v1861, %v1879
        %v1947 = vadd.f32 %v1862, %v1883
        %v1948 = vadd.f32 %v1863, %v1871
        %v1949 = vadd.f32 %v1864, %v1875
        %v1950 = vadd.f32 %v1865, %v1879
        %v1951 = vadd.f32 %v1866, %v1883
        %v1952 = vmax.f32 %v1888, 0.0
        %v1953 = vmax.f32 %v1889, 0.0
        %v1954 = vmax.f32 %v1890, 0.0
        %v1955 = vmax.f32 %v1891, 0.0
        %v1956 = vmax.f32 %v1892, 0.0
        %v1957 = vmax.f32 %v1893, 0.0
        %v1958 = vmax.f32 %v1894, 0.0
        %v1959 = vmax.f32 %v1895, 0.0
        %v1960 = vmax.f32 %v1896, 0.0
        %v1961 = vmax.f32 %v1897, 0.0
        %v1962 = vmax.f32 %v1898, 0.0
        %v1963 = vmax.f32 %v1899, 0.0
        %v1964 = vmax.f32 %v1900, 0.0
        %v1965 = vmax.f32 %v1901, 0.0
        %v1966 = vmax.f32 %v1902, 0.0
        %v1967 = vmax.f32 %v1903, 0.0
        %v1968 = vmax.f32 %v1904, 0.0
        %v1969 = vmax.f32 %v1905, 0.0
        %v1970 = vmax.f32 %v1906, 0.0
        %v1971 = vmax.f32 %v1907, 0.0
        %v1972 = vmax.f32 %v1908, 0.0
        %v1973 = vmax.f32 %v1909, 0.0
        %v1974 = vmax.f32 %v1910, 0.0
        %v1975 = vmax.f32 %v1911, 0.0
        %v1976 = vmax.f32 %v1912, 0.0
        %v1977 = vmax.f32 %v1913, 0.0
        %v1978 = vmax.f32 %v1914, 0.0
        %v1979 = vmax.f32 %v1915, 0.0
        %v1980 = vmax.f32 %v1916, 0.0
        %v1981 = vmax.f32 %v1917, 0.0
        %v1982 = vmax.f32 %v1918, 0.0
        %v1983 = vmax.f32 %v1919, 0.0
        %v1984 = vmax.f32 %v1920, 0.0
        %v1985 = vmax.f32 %v1921, 0.0
        %v1986 = vmax.f32 %v1922, 0.0
        %v1987 = vmax.f32 %v1923, 0.0
        %v1988 = vmax.f32 %v1924, 0.0
        %v1989 = vmax.f32 %v1925, 0.0
        %v1990 = vmax.f32 %v1926, 0.0
        %v1991 = vmax.f32 %v1927, 0.0
        %v1992 = vmax.f32 %v1928, 0.0
        %v1993 = vmax.f32 %v1929, 0.0
        %v1994 = vmax.f32 %v1930, 0.0
        %v1995 = vmax.f32 %v1931, 0.0
        %v1996 = vmax.f32 %v1932, 0.0
        %v1997 = vmax.f32 %v1933, 0.0
        %v1998 = vmax.f32 %v1934, 0.0
        %v1999 = vmax.f32 %v1935, 0.0
        %v2000 = vmax.f32 %v1936, 0.0
        %v2001 = vmax.f32 %v1937, 0.0
        %v2002 = vmax.f32 %v1938, 0.0
        %v2003 = vmax.f32 %v1939, 0.0
        %v2004 = vmax.f32 %v1940, 0.0
        %v2005 = vmax.f32 %v1941, 0.0
        %v2006 = vmax.f32 %v1942, 0.0
        %v2007 = vmax.f32 %v1943, 0.0
        %v2008 = vmax.f32 %v1944, 0.0
        %v2009 = vmax.f32 %v1945, 0.0
        %v2010 = vmax.f32 %v1946, 0.0
        %v2011 = vmax.f32 %v1947, 0.0
        %v2012 = vmax.f32 %v1948, 0.0
        %v2013 = vmax.f32 %v1949, 0.0
        %v2014 = vmax.f32 %v1950, 0.0
        %v2015 = vmax.f32 %v1951, 0.0
        %2016 = vst [vmem:[#allocation2] sm:$0xff] %v1952
        %2017 = vst [vmem:[#allocation2 + $0x8] sm:$0xff] %v1953
        %2018 = vst [vmem:[#allocation2 + $0x10] sm:$0xff] %v1954
        %2019 = vst [vmem:[#allocation2 + $0x18] sm:$0xff] %v1955
        %2020 = vst [vmem:[#allocation2 + $0x20] sm:$0xff] %v1956
        %2021 = vst [vmem:[#allocation2 + $0x28] sm:$0xff] %v1957
        %2022 = vst [vmem:[#allocation2 + $0x30] sm:$0xff] %v1958
        %2023 = vst [vmem:[#allocation2 + $0x38] sm:$0xff] %v1959
        %2024 = vst [vmem:[#allocation2 + $0x40] sm:$0xff] %v1960
        %2025 = vst [vmem:[#allocation2 + $0x48] sm:$0xff] %v1961
        %2026 = vst [vmem:[#allocation2 + $0x50] sm:$0xff] %v1962
        %2027 = vst [vmem:[#allocation2 + $0x58] sm:$0xff] %v1963
        %2028 = vst [vmem:[#allocation2 + $0x60] sm:$0xff] %v1964
        %2029 = vst [vmem:[#allocation2 + $0x68] sm:$0xff] %v1965
        %2030 = vst [vmem:[#allocation2 + $0x70] sm:$0xff] %v1966
        %2031 = vst [vmem:[#allocation2 + $0x78] sm:$0xff] %v1967
        %2032 = vst [vmem:[#allocation2 + $0x80] sm:$0xff] %v1968
        %2033 = vst [vmem:[#allocation2 + $0x88] sm:$0xff] %v1969
        %2034 = vst [vmem:[#allocation2 + $0x90] sm:$0xff] %v1970
        %2035 = vst [vmem:[#allocation2 + $0x98] sm:$0xff] %v1971
        %2036 = vst [vmem:[#allocation2 + $0xa0] sm:$0xff] %v1972
        %2037 = vst [vmem:[#allocation2 + $0xa8] sm:$0xff] %v1973
        %2038 = vst [vmem:[#allocation2 + $0xb0] sm:$0xff] %v1974
        %2039 = vst [vmem:[#allocation2 + $0xb8] sm:$0xff] %v1975
        %2040 = vst [vmem:[#allocation2 + $0xc0] sm:$0xff] %v1976
        %2041 = vst [vmem:[#allocation2 + $0xc8] sm:$0xff] %v1977
        %2042 = vst [vmem:[#allocation2 + $0xd0] sm:$0xff] %v1978
        %2043 = vst [vmem:[#allocation2 + $0xd8] sm:$0xff] %v1979
        %2044 = vst [vmem:[#allocation2 + $0xe0] sm:$0xff] %v1980
        %2045 = vst [vmem:[#allocation2 + $0xe8] sm:$0xff] %v1981
        %2046 = vst [vmem:[#allocation2 + $0xf0] sm:$0xff] %v1982
        %2047 = vst [vmem:[#allocation2 + $0xf8] sm:$0xff] %v1983
        %2048 = vst [vmem:[#allocation2 + $0x100] sm:$0xff] %v1984
        %2049 = vst [vmem:[#allocation2 + $0x108] sm:$0xff] %v1985
        %2050 = vst [vmem:[#allocation2 + $0x110] sm:$0xff] %v1986
        %2051 = vst [vmem:[#allocation2 + $0x118] sm:$0xff] %v1987
        %2052 = vst [vmem:[#allocation2 + $0x120] sm:$0xff] %v1988
        %2053 = vst [vmem:[#allocation2 + $0x128] sm:$0xff] %v1989
        %2054 = vst [vmem:[#allocation2 + $0x130] sm:$0xff] %v1990
        %2055 = vst [vmem:[#allocation2 + $0x138] sm:$0xff] %v1991
        %2056 = vst [vmem:[#allocation2 + $0x140] sm:$0xff] %v1992
        %2057 = vst [vmem:[#allocation2 + $0x148] sm:$0xff] %v1993
        %2058 = vst [vmem:[#allocation2 + $0x150] sm:$0xff] %v1994
        %2059 = vst [vmem:[#allocation2 + $0x158] sm:$0xff] %v1995
        %2060 = vst [vmem:[#allocation2 + $0x160] sm:$0xff] %v1996
        %2061 = vst [vmem:[#allocation2 + $0x168] sm:$0xff] %v1997
        %2062 = vst [vmem:[#allocation2 + $0x170] sm:$0xff] %v1998
        %2063 = vst [vmem:[#allocation2 + $0x178] sm:$0xff] %v1999
        %2064 = vst [vmem:[#allocation2 + $0x180] sm:$0xff] %v2000
        %2065 = vst [vmem:[#allocation2 + $0x188] sm:$0xff] %v2001
        %2066 = vst [vmem:[#allocation2 + $0x190] sm:$0xff] %v2002
        %2067 = vst [vmem:[#allocation2 + $0x198] sm:$0xff] %v2003
        %2068 = vst [vmem:[#allocation2 + $0x1a0] sm:$0xff] %v2004
        %2069 = vst [vmem:[#allocation2 + $0x1a8] sm:$0xff] %v2005
        %2070 = vst [vmem:[#allocation2 + $0x1b0] sm:$0xff] %v2006
        %2071 = vst [vmem:[#allocation2 + $0x1b8] sm:$0xff] %v2007
        %2072 = vst [vmem:[#allocation2 + $0x1c0] sm:$0xff] %v2008
        %2073 = vst [vmem:[#allocation2 + $0x1c8] sm:$0xff] %v2009
        %2074 = vst [vmem:[#allocation2 + $0x1d0] sm:$0xff] %v2010
        %2075 = vst [vmem:[#allocation2 + $0x1d8] sm:$0xff] %v2011
        %2076 = vst [vmem:[#allocation2 + $0x1e0] sm:$0xff] %v2012
        %2077 = vst [vmem:[#allocation2 + $0x1e8] sm:$0xff] %v2013
        %2078 = vst [vmem:[#allocation2 + $0x1f0] sm:$0xff] %v2014
        %2079 = vst [vmem:[#allocation2 + $0x1f8] sm:$0xff] %v2015
        %p2080 = scmp.eq.s32.totalorder %s26, 3
        // Predicated region
        $region69: #{tpu_custom_call.1} parent=43 // pred_check
          %p2081 = pneg %p2080
        $region70: #{tpu_custom_call.1} parent=43 // pred_check_branch
          %2083 = sbr.rel (%p2081) target = $region72
        $region71: #{tpu_custom_call.1} parent=43 // pred_region
          %v2084 = vld [vmem:[#allocation2] sm:$0xff]
          %v2085 = vld [vmem:[#allocation2 + $0x8] sm:$0xff]
          %v2086 = vld [vmem:[#allocation2 + $0x10] sm:$0xff]
          %v2087 = vld [vmem:[#allocation2 + $0x18] sm:$0xff]
          %v2088 = vld [vmem:[#allocation2 + $0x20] sm:$0xff]
          %v2089 = vld [vmem:[#allocation2 + $0x28] sm:$0xff]
          %v2090 = vld [vmem:[#allocation2 + $0x30] sm:$0xff]
          %v2091 = vld [vmem:[#allocation2 + $0x38] sm:$0xff]
          %v2092 = vld [vmem:[#allocation2 + $0x40] sm:$0xff]
          %v2093 = vld [vmem:[#allocation2 + $0x48] sm:$0xff]
          %v2094 = vld [vmem:[#allocation2 + $0x50] sm:$0xff]
          %v2095 = vld [vmem:[#allocation2 + $0x58] sm:$0xff]
          %v2096 = vld [vmem:[#allocation2 + $0x60] sm:$0xff]
          %v2097 = vld [vmem:[#allocation2 + $0x68] sm:$0xff]
          %v2098 = vld [vmem:[#allocation2 + $0x70] sm:$0xff]
          %v2099 = vld [vmem:[#allocation2 + $0x78] sm:$0xff]
          %v2100 = vld [vmem:[#allocation2 + $0x80] sm:$0xff]
          %v2101 = vld [vmem:[#allocation2 + $0x88] sm:$0xff]
          %v2102 = vld [vmem:[#allocation2 + $0x90] sm:$0xff]
          %v2103 = vld [vmem:[#allocation2 + $0x98] sm:$0xff]
          %v2104 = vld [vmem:[#allocation2 + $0xa0] sm:$0xff]
          %v2105 = vld [vmem:[#allocation2 + $0xa8] sm:$0xff]
          %v2106 = vld [vmem:[#allocation2 + $0xb0] sm:$0xff]
          %v2107 = vld [vmem:[#allocation2 + $0xb8] sm:$0xff]
          %v2108 = vld [vmem:[#allocation2 + $0xc0] sm:$0xff]
          %v2109 = vld [vmem:[#allocation2 + $0xc8] sm:$0xff]
          %v2110 = vld [vmem:[#allocation2 + $0xd0] sm:$0xff]
          %v2111 = vld [vmem:[#allocation2 + $0xd8] sm:$0xff]
          %v2112 = vld [vmem:[#allocation2 + $0xe0] sm:$0xff]
          %v2113 = vld [vmem:[#allocation2 + $0xe8] sm:$0xff]
          %v2114 = vld [vmem:[#allocation2 + $0xf0] sm:$0xff]
          %v2115 = vld [vmem:[#allocation2 + $0xf8] sm:$0xff]
          %v2116 = vld [vmem:[#allocation2 + $0x100] sm:$0xff]
          %v2117 = vld [vmem:[#allocation2 + $0x108] sm:$0xff]
          %v2118 = vld [vmem:[#allocation2 + $0x110] sm:$0xff]
          %v2119 = vld [vmem:[#allocation2 + $0x118] sm:$0xff]
          %v2120 = vld [vmem:[#allocation2 + $0x120] sm:$0xff]
          %v2121 = vld [vmem:[#allocation2 + $0x128] sm:$0xff]
          %v2122 = vld [vmem:[#allocation2 + $0x130] sm:$0xff]
          %v2123 = vld [vmem:[#allocation2 + $0x138] sm:$0xff]
          %v2124 = vld [vmem:[#allocation2 + $0x140] sm:$0xff]
          %v2125 = vld [vmem:[#allocation2 + $0x148] sm:$0xff]
          %v2126 = vld [vmem:[#allocation2 + $0x150] sm:$0xff]
          %v2127 = vld [vmem:[#allocation2 + $0x158] sm:$0xff]
          %v2128 = vld [vmem:[#allocation2 + $0x160] sm:$0xff]
          %v2129 = vld [vmem:[#allocation2 + $0x168] sm:$0xff]
          %v2130 = vld [vmem:[#allocation2 + $0x170] sm:$0xff]
          %v2131 = vld [vmem:[#allocation2 + $0x178] sm:$0xff]
          %v2132 = vld [vmem:[#allocation2 + $0x180] sm:$0xff]
          %v2133 = vld [vmem:[#allocation2 + $0x188] sm:$0xff]
          %v2134 = vld [vmem:[#allocation2 + $0x190] sm:$0xff]
          %v2135 = vld [vmem:[#allocation2 + $0x198] sm:$0xff]
          %v2136 = vld [vmem:[#allocation2 + $0x1a0] sm:$0xff]
          %v2137 = vld [vmem:[#allocation2 + $0x1a8] sm:$0xff]
          %v2138 = vld [vmem:[#allocation2 + $0x1b0] sm:$0xff]
          %v2139 = vld [vmem:[#allocation2 + $0x1b8] sm:$0xff]
          %v2140 = vld [vmem:[#allocation2 + $0x1c0] sm:$0xff]
          %v2141 = vld [vmem:[#allocation2 + $0x1c8] sm:$0xff]
          %v2142 = vld [vmem:[#allocation2 + $0x1d0] sm:$0xff]
          %v2143 = vld [vmem:[#allocation2 + $0x1d8] sm:$0xff]
          %v2144 = vld [vmem:[#allocation2 + $0x1e0] sm:$0xff]
          %v2145 = vld [vmem:[#allocation2 + $0x1e8] sm:$0xff]
          %v2146 = vld [vmem:[#allocation2 + $0x1f0] sm:$0xff]
          %v2147 = vld [vmem:[#allocation2 + $0x1f8] sm:$0xff]
          %v2148 = vld [vmem:[#allocation11] sm:$0xf]
          %v2150 = vlaneseq
          %v2151 = vshrl.u32 %v2150, 7
          %v2152 = vsub.s32 0, %v2151
          %v2153 = vrot.slane %v2148, %v2152
          %v2154 = vlaneseq
          %v2155 = vshrl.u32 %v2154, 7
          %v2156 = vsub.s32 1, %v2155
          %v2157 = vrot.slane %v2148, %v2156
          %v2158 = vlaneseq
          %v2159 = vshrl.u32 %v2158, 7
          %v2160 = vsub.s32 2, %v2159
          %v2161 = vrot.slane %v2148, %v2160
          %v2162 = vlaneseq
          %v2163 = vshrl.u32 %v2162, 7
          %v2164 = vsub.s32 3, %v2163
          %v2165 = vrot.slane %v2148, %v2164
          %v2170 = vmul.f32 %v2084, %v2153
          %v2171 = vmul.f32 %v2085, %v2157
          %v2172 = vmul.f32 %v2086, %v2161
          %v2173 = vmul.f32 %v2087, %v2165
          %v2174 = vmul.f32 %v2088, %v2153
          %v2175 = vmul.f32 %v2089, %v2157
          %v2176 = vmul.f32 %v2090, %v2161
          %v2177 = vmul.f32 %v2091, %v2165
          %v2178 = vmul.f32 %v2092, %v2153
          %v2179 = vmul.f32 %v2093, %v2157
          %v2180 = vmul.f32 %v2094, %v2161
          %v2181 = vmul.f32 %v2095, %v2165
          %v2182 = vmul.f32 %v2096, %v2153
          %v2183 = vmul.f32 %v2097, %v2157
          %v2184 = vmul.f32 %v2098, %v2161
          %v2185 = vmul.f32 %v2099, %v2165
          %v2186 = vmul.f32 %v2100, %v2153
          %v2187 = vmul.f32 %v2101, %v2157
          %v2188 = vmul.f32 %v2102, %v2161
          %v2189 = vmul.f32 %v2103, %v2165
          %v2190 = vmul.f32 %v2104, %v2153
          %v2191 = vmul.f32 %v2105, %v2157
          %v2192 = vmul.f32 %v2106, %v2161
          %v2193 = vmul.f32 %v2107, %v2165
          %v2194 = vmul.f32 %v2108, %v2153
          %v2195 = vmul.f32 %v2109, %v2157
          %v2196 = vmul.f32 %v2110, %v2161
          %v2197 = vmul.f32 %v2111, %v2165
          %v2198 = vmul.f32 %v2112, %v2153
          %v2199 = vmul.f32 %v2113, %v2157
          %v2200 = vmul.f32 %v2114, %v2161
          %v2201 = vmul.f32 %v2115, %v2165
          %v2202 = vmul.f32 %v2116, %v2153
          %v2203 = vmul.f32 %v2117, %v2157
          %v2204 = vmul.f32 %v2118, %v2161
          %v2205 = vmul.f32 %v2119, %v2165
          %v2206 = vmul.f32 %v2120, %v2153
          %v2207 = vmul.f32 %v2121, %v2157
          %v2208 = vmul.f32 %v2122, %v2161
          %v2209 = vmul.f32 %v2123, %v2165
          %v2210 = vmul.f32 %v2124, %v2153
          %v2211 = vmul.f32 %v2125, %v2157
          %v2212 = vmul.f32 %v2126, %v2161
          %v2213 = vmul.f32 %v2127, %v2165
          %v2214 = vmul.f32 %v2128, %v2153
          %v2215 = vmul.f32 %v2129, %v2157
          %v2216 = vmul.f32 %v2130, %v2161
          %v2217 = vmul.f32 %v2131, %v2165
          %v2218 = vmul.f32 %v2132, %v2153
          %v2219 = vmul.f32 %v2133, %v2157
          %v2220 = vmul.f32 %v2134, %v2161
          %v2221 = vmul.f32 %v2135, %v2165
          %v2222 = vmul.f32 %v2136, %v2153
          %v2223 = vmul.f32 %v2137, %v2157
          %v2224 = vmul.f32 %v2138, %v2161
          %v2225 = vmul.f32 %v2139, %v2165
          %v2226 = vmul.f32 %v2140, %v2153
          %v2227 = vmul.f32 %v2141, %v2157
          %v2228 = vmul.f32 %v2142, %v2161
          %v2229 = vmul.f32 %v2143, %v2165
          %v2230 = vmul.f32 %v2144, %v2153
          %v2231 = vmul.f32 %v2145, %v2157
          %v2232 = vmul.f32 %v2146, %v2161
          %v2233 = vmul.f32 %v2147, %v2165
          %v2234 = vadd.f32 %v2170, %v2171
          %v2235 = vadd.f32 %v2234, %v2172
          %v2236 = vadd.f32 %v2235, %v2173
          %2237 = vadd.xlane.f32.xlu0 %v2236
          %v2238 = vpop.xlane.xlu0 %2237
          %v2239 = vadd.f32 %v2174, %v2175
          %v2240 = vadd.f32 %v2239, %v2176
          %v2241 = vadd.f32 %v2240, %v2177
          %2242 = vadd.xlane.f32.xlu0 %v2241
          %v2243 = vpop.xlane.xlu0 %2242
          %v2244 = vadd.f32 %v2178, %v2179
          %v2245 = vadd.f32 %v2244, %v2180
          %v2246 = vadd.f32 %v2245, %v2181
          %2247 = vadd.xlane.f32.xlu0 %v2246
          %v2248 = vpop.xlane.xlu0 %2247
          %v2249 = vadd.f32 %v2182, %v2183
          %v2250 = vadd.f32 %v2249, %v2184
          %v2251 = vadd.f32 %v2250, %v2185
          %2252 = vadd.xlane.f32.xlu0 %v2251
          %v2253 = vpop.xlane.xlu0 %2252
          %v2254 = vadd.f32 %v2186, %v2187
          %v2255 = vadd.f32 %v2254, %v2188
          %v2256 = vadd.f32 %v2255, %v2189
          %2257 = vadd.xlane.f32.xlu0 %v2256
          %v2258 = vpop.xlane.xlu0 %2257
          %v2259 = vadd.f32 %v2190, %v2191
          %v2260 = vadd.f32 %v2259, %v2192
          %v2261 = vadd.f32 %v2260, %v2193
          %2262 = vadd.xlane.f32.xlu0 %v2261
          %v2263 = vpop.xlane.xlu0 %2262
          %v2264 = vadd.f32 %v2194, %v2195
          %v2265 = vadd.f32 %v2264, %v2196
          %v2266 = vadd.f32 %v2265, %v2197
          %2267 = vadd.xlane.f32.xlu0 %v2266
          %v2268 = vpop.xlane.xlu0 %2267
          %v2269 = vadd.f32 %v2198, %v2199
          %v2270 = vadd.f32 %v2269, %v2200
          %v2271 = vadd.f32 %v2270, %v2201
          %2272 = vadd.xlane.f32.xlu0 %v2271
          %v2273 = vpop.xlane.xlu0 %2272
          %v2274 = vadd.f32 %v2202, %v2203
          %v2275 = vadd.f32 %v2274, %v2204
          %v2276 = vadd.f32 %v2275, %v2205
          %2277 = vadd.xlane.f32.xlu0 %v2276
          %v2278 = vpop.xlane.xlu0 %2277
          %v2279 = vadd.f32 %v2206, %v2207
          %v2280 = vadd.f32 %v2279, %v2208
          %v2281 = vadd.f32 %v2280, %v2209
          %2282 = vadd.xlane.f32.xlu0 %v2281
          %v2283 = vpop.xlane.xlu0 %2282
          %v2284 = vadd.f32 %v2210, %v2211
          %v2285 = vadd.f32 %v2284, %v2212
          %v2286 = vadd.f32 %v2285, %v2213
          %2287 = vadd.xlane.f32.xlu0 %v2286
          %v2288 = vpop.xlane.xlu0 %2287
          %v2289 = vadd.f32 %v2214, %v2215
          %v2290 = vadd.f32 %v2289, %v2216
          %v2291 = vadd.f32 %v2290, %v2217
          %2292 = vadd.xlane.f32.xlu0 %v2291
          %v2293 = vpop.xlane.xlu0 %2292
          %v2294 = vadd.f32 %v2218, %v2219
          %v2295 = vadd.f32 %v2294, %v2220
          %v2296 = vadd.f32 %v2295, %v2221
          %2297 = vadd.xlane.f32.xlu0 %v2296
          %v2298 = vpop.xlane.xlu0 %2297
          %v2299 = vadd.f32 %v2222, %v2223
          %v2300 = vadd.f32 %v2299, %v2224
          %v2301 = vadd.f32 %v2300, %v2225
          %2302 = vadd.xlane.f32.xlu0 %v2301
          %v2303 = vpop.xlane.xlu0 %2302
          %v2304 = vadd.f32 %v2226, %v2227
          %v2305 = vadd.f32 %v2304, %v2228
          %v2306 = vadd.f32 %v2305, %v2229
          %2307 = vadd.xlane.f32.xlu0 %v2306
          %v2308 = vpop.xlane.xlu0 %2307
          %v2309 = vadd.f32 %v2230, %v2231
          %v2310 = vadd.f32 %v2309, %v2232
          %v2311 = vadd.f32 %v2310, %v2233
          %2312 = vadd.xlane.f32.xlu0 %v2311
          %v2313 = vpop.xlane.xlu0 %2312
          %v2314 = vld [vmem:[#allocation3] sm:$0x1]
          %v2316 = vlaneseq
          %v2317 = vshrl.u32 %v2316, 7
          %v2318 = vsub.s32 0, %v2317
          %v2319 = vrot.slane %v2314, %v2318
          %v2321 = vadd.f32 %v2238, %v2319
          %v2322 = vadd.f32 %v2243, %v2319
          %v2323 = vadd.f32 %v2248, %v2319
          %v2324 = vadd.f32 %v2253, %v2319
          %v2325 = vadd.f32 %v2258, %v2319
          %v2326 = vadd.f32 %v2263, %v2319
          %v2327 = vadd.f32 %v2268, %v2319
          %v2328 = vadd.f32 %v2273, %v2319
          %v2329 = vadd.f32 %v2278, %v2319
          %v2330 = vadd.f32 %v2283, %v2319
          %v2331 = vadd.f32 %v2288, %v2319
          %v2332 = vadd.f32 %v2293, %v2319
          %v2333 = vadd.f32 %v2298, %v2319
          %v2334 = vadd.f32 %v2303, %v2319
          %v2335 = vadd.f32 %v2308, %v2319
          %v2336 = vadd.f32 %v2313, %v2319
          %vm2337 = vcmask 7168
          %2338 = vst.msk [vmem:[%s6] sm:$0xff] %vm2337, %v2321
          %2339 = vst.msk [vmem:[%s6 + $0x8] sm:$0xff] %vm2337, %v2322
          %2340 = vst.msk [vmem:[%s6 + $0x10] sm:$0xff] %vm2337, %v2323
          %2341 = vst.msk [vmem:[%s6 + $0x18] sm:$0xff] %vm2337, %v2324
          %2342 = vst.msk [vmem:[%s6 + $0x20] sm:$0xff] %vm2337, %v2325
          %2343 = vst.msk [vmem:[%s6 + $0x28] sm:$0xff] %vm2337, %v2326
          %2344 = vst.msk [vmem:[%s6 + $0x30] sm:$0xff] %vm2337, %v2327
          %2345 = vst.msk [vmem:[%s6 + $0x38] sm:$0xff] %vm2337, %v2328
          %2346 = vst.msk [vmem:[%s6 + $0x40] sm:$0xff] %vm2337, %v2329
          %2347 = vst.msk [vmem:[%s6 + $0x48] sm:$0xff] %vm2337, %v2330
          %2348 = vst.msk [vmem:[%s6 + $0x50] sm:$0xff] %vm2337, %v2331
          %2349 = vst.msk [vmem:[%s6 + $0x58] sm:$0xff] %vm2337, %v2332
          %2350 = vst.msk [vmem:[%s6 + $0x60] sm:$0xff] %vm2337, %v2333
          %2351 = vst.msk [vmem:[%s6 + $0x68] sm:$0xff] %vm2337, %v2334
          %2352 = vst.msk [vmem:[%s6 + $0x70] sm:$0xff] %vm2337, %v2335
          %2353 = vst.msk [vmem:[%s6 + $0x78] sm:$0xff] %vm2337, %v2336
        $region72: #{tpu_custom_call.1} parent=43 // pred_fallthru
          _
        // Predicated region
        $region73: #{tpu_custom_call.1} parent=43 // pred_check
          %p2354 = pneg %p180
        $region74: #{tpu_custom_call.1} parent=43 // pred_check_branch
          %2356 = sbr.rel (%p2354) target = $region76
        $region75: #{tpu_custom_call.1} parent=43 // pred_region
          _
        $region76: #{tpu_custom_call.1} parent=43 // pred_fallthru
          _
        // Predicated region
        $region77: #{tpu_custom_call.1} parent=43 // pred_check
          %p2357 = pneg %p180
        $region78: #{tpu_custom_call.1} parent=43 // pred_check_branch
          %2359 = sbr.rel (%p2357) target = $region80
        $region79: #{tpu_custom_call.1} parent=43 // pred_region
          _
        $region80: #{tpu_custom_call.1} parent=43 // pred_fallthru
          _
      $region44: #{tpu_custom_call.1} parent=5 // pred_fallthru
        _
      %p2360 = scmp.le.s32.totalorder 2, %s21
      // Predicated region
      $region81: #{tpu_custom_call.1} parent=5 // pred_check
        %p2361 = pneg %p2360
      $region82: #{tpu_custom_call.1} parent=5 // pred_check_branch
        %2363 = sbr.rel (%p2361) target = $region84
      $region83: #{tpu_custom_call.1} parent=5 // pred_region
        %s2364 = ssub.s32 %s21, 2
      $region84: #{tpu_custom_call.1} parent=5 // pred_fallthru
        _
    $region6: #{tpu_custom_call.1} parent=1 // loop_footer
      %s25 = sadd.s32 1, %s21
    $region7: #{tpu_custom_call.1} parent=1 // loop_footer_branch
      %20 = sbr.rel target = $region3
    $region8: #{tpu_custom_call.1} parent=1 // loop_exit
      _
    %2365 = vsyncpa [#allocation5], 1
    %s2366 = scalar_lea.sflag [#allocation5], 1
    %2367 = vsyncpa %s2366, 1
    %2368 = vsyncpa [#allocation7], 1
    %s2369 = scalar_lea.sflag [#allocation7], 1
    %2370 = vsyncpa %s2369, 1
    %2371 = vsyncpa [#allocation10], 1
    %s2372 = scalar_lea.sflag [#allocation10], 1
    %2373 = vsyncpa %s2372, 1

</llo_original>
